<compile_context>
chip_gen: v6e
topology: v6e:2x2x1
jax: 0.10.0
libtpu: 0.0.40
codegen_flags: <defaults>
</compile_context>

<pallas_src>
import functools

import jax
import jax.numpy as jnp
from jax.experimental import pallas as pl
from jax.experimental.pallas import tpu as pltpu


# ----------------------------------------------------------------------------- utilities


def _vmem_capacity_bytes():
    """Per-TensorCore VMEM capacity; conservative fallback = v7x (64 MiB)."""
    try:
        info = pltpu.get_tpu_info()
        cap = getattr(info, "vmem_capacity_bytes", None)
        if cap:
            return int(cap)
    except Exception:
        pass
    return 64 << 20


def _choose_tile_v(v_padded, hidden_dim, batch, vmem_budget):
    """Largest lane-aligned vocab tile whose (double-buffered) working set fits the budget."""
    candidates = sorted(
        {c for c in (v_padded, 8192, 4096, 2048, 1024, 512, 256, 128)
         if c <= v_padded and v_padded % c == 0},
        reverse=True,
    )
    for t in candidates:
        need = 2 * (hidden_dim * t * 2      # bf16 weight tile, double-buffered
                    + t * 4                 # f32 bias tile
                    + batch * t * 4)        # f32 logits tile
        need += batch * hidden_dim * 4      # resident x_final
        if need + (2 << 20) <= vmem_budget:
            return t
    return candidates[-1]                   # 128 always divides the padded vocab


# ----------------------------------------------------------------------------- kernels


def make_lstm_kernel(num_layers, hidden_dim, batch):
    L, H, B = num_layers, hidden_dim, batch

    def kernel(ids_ref, emb_hbm, h_ref, c_ref, *rest):
        # rest = [w_ih_t, w_hh_t, bias] * L, h_out, c_out, x_out, emb_vmem, sem
        w_refs = rest[: 3 * L]
        h_out_ref = rest[3 * L]
        c_out_ref = rest[3 * L + 1]
        x_out_ref = rest[3 * L + 2]
        emb_vmem = rest[3 * L + 3]
        sem = rest[3 * L + 4]

        # In-kernel embedding gather: B small HBM->VMEM row DMAs, indices read from SMEM.
        copies = []
        for b in range(B):
            cp = pltpu.make_async_copy(
                emb_hbm.at[pl.ds(ids_ref[b], 1), :],
                emb_vmem.at[pl.ds(b, 1), :],
                sem.at[b],
            )
            cp.start()
            copies.append(cp)
        for cp in copies:
            cp.wait()

        # Dropout(embedded) is eval-mode identity.
        x = emb_vmem[...]                                      # (B, E) f32
        for l in range(L):                                     # static unroll over layers
            w_ih_t = w_refs[3 * l][...]                        # (in_dim, 4H) bf16
            w_hh_t = w_refs[3 * l + 1][...]                    # (H, 4H) bf16
            bias = w_refs[3 * l + 2][...]                      # (1, 4H) f32 (b_ih + b_hh)
            h_prev = h_ref[l]                                  # (B, H) f32
            c_prev = c_ref[l]                                  # (B, H) f32

            # Two MXU pushes per layer (bf16 operands, f32 accumulate); no concat copy.
            gates = (
                jnp.dot(x.astype(jnp.bfloat16), w_ih_t, preferred_element_type=jnp.float32)
                + jnp.dot(h_prev.astype(jnp.bfloat16), w_hh_t, preferred_element_type=jnp.float32)
                + bias
            )

            # PyTorch LSTM gate order: i, f, g, o (H multiple of 128 -> aligned slices).
            i = jax.nn.sigmoid(gates[:, 0:H])
            f = jax.nn.sigmoid(gates[:, H:2 * H])
            g = jnp.tanh(gates[:, 2 * H:3 * H])
            o = jax.nn.sigmoid(gates[:, 3 * H:4 * H])

            c_new = f * c_prev + i * g
            h_new = o * jnp.tanh(c_new)

            h_out_ref[l] = h_new
            c_out_ref[l] = c_new
            x = h_new                                          # inter-layer dropout = identity

        x_out_ref[...] = x

    return kernel


def proj_kernel(x_ref, w_ref, b_ref, out_ref):
    # (B, H) f32 -> bf16 @ (H, TILE_V) bf16 -> (B, TILE_V) f32 (+ bias).
    x = x_ref[...].astype(jnp.bfloat16)
    out_ref[...] = jnp.dot(x, w_ref[...], preferred_element_type=jnp.float32) + b_ref[...]


# ----------------------------------------------------------------------------- params


def init_decoder_params(key, output_dim, emb_dim, hidden_dim, num_layers):
    """Deterministic synthetic parameters matching the PyTorch module's shapes (f32)."""
    params = {}
    keys = jax.random.split(key, 4 + 4 * num_layers)
    kidx = 0

    params["embedding"] = jax.random.normal(keys[kidx], (output_dim, emb_dim), jnp.float32) * 0.1
    kidx += 1

    lstm = []
    for l in range(num_layers):
        in_dim = emb_dim if l == 0 else hidden_dim
        w_ih = jax.random.normal(keys[kidx], (4 * hidden_dim, in_dim), jnp.float32) * 0.1; kidx += 1
        w_hh = jax.random.normal(keys[kidx], (4 * hidden_dim, hidden_dim), jnp.float32) * 0.1; kidx += 1
        b_ih = jax.random.normal(keys[kidx], (4 * hidden_dim,), jnp.float32) * 0.1; kidx += 1
        b_hh = jax.random.normal(keys[kidx], (4 * hidden_dim,), jnp.float32) * 0.1; kidx += 1
        lstm.append({"w_ih": w_ih, "w_hh": w_hh, "b_ih": b_ih, "b_hh": b_hh})
    params["lstm"] = lstm

    params["out_w"] = jax.random.normal(keys[kidx], (output_dim, hidden_dim), jnp.float32) * 0.1; kidx += 1
    params["out_b"] = jax.random.normal(keys[kidx], (output_dim,), jnp.float32) * 0.1
    return params


def prepare_decoder_params(params):
    """One-time weight prep, hoisted out of the per-token decode step.

    Transposes LSTM / output weights, fuses b_ih + b_hh, casts streamed weights to bf16, and
    pads the vocab dimension of the output projection to a multiple of 128.
    """
    prep = {"embedding": params["embedding"].astype(jnp.float32)}
    lstm = []
    for lw in params["lstm"]:
        lstm.append({
            "w_ih_t": jnp.transpose(lw["w_ih"]).astype(jnp.bfloat16),           # (in_dim, 4H)
            "w_hh_t": jnp.transpose(lw["w_hh"]).astype(jnp.bfloat16),           # (H, 4H)
            "b": (lw["b_ih"] + lw["b_hh"]).reshape(1, -1).astype(jnp.float32),  # (1, 4H)
        })
    prep["lstm"] = lstm

    V, _H = params["out_w"].shape
    Vp = ((V + 127) // 128) * 128
    out_w_t = jnp.transpose(params["out_w"]).astype(jnp.bfloat16)               # (H, V)
    out_b = params["out_b"].reshape(1, -1).astype(jnp.float32)                  # (1, V)
    if Vp != V:
        out_w_t = jnp.pad(out_w_t, ((0, 0), (0, Vp - V)))
        out_b = jnp.pad(out_b, ((0, 0), (0, Vp - V)))
    prep["out_w_t"] = out_w_t                                                   # (H, Vp) bf16
    prep["out_b"] = out_b                                                       # (1, Vp) f32
    return prep


# ----------------------------------------------------------------------------- forward


@functools.partial(jax.jit, static_argnames=("vocab",))
def decoder_forward(target, hidden, cell, prep, *, vocab):
    """Pallas-backed equivalent of Decoder.forward (eval mode: dropout = identity)."""
    L, B, H = hidden.shape
    _V_tbl, E = prep["embedding"].shape
    _Hp, Vp = prep["out_w_t"].shape

    vmem_cap = _vmem_capacity_bytes()
    vmem_hard_cap = int(0.85 * vmem_cap)

    # ------------------------------------------------ call 1: embedding gather + LSTM stack
    lstm_inputs = [target[:, 0].astype(jnp.int32), prep["embedding"], hidden, cell]
    lstm_in_specs = [
        pl.BlockSpec(memory_space=pltpu.MemorySpace.SMEM),          # token ids (B,) -> SMEM
        pl.BlockSpec(memory_space=pl.ANY),                          # embedding table stays in HBM
        pl.BlockSpec((L, B, H), lambda i: (0, 0, 0), pipeline_mode=pl.Buffered(1)),
        pl.BlockSpec((L, B, H), lambda i: (0, 0, 0), pipeline_mode=pl.Buffered(1)),
    ]
    lstm_bytes = 4 * L * B * H * 4 + B * E * 4 + B * H * 4
    for lw in prep["lstm"]:
        lstm_inputs += [lw["w_ih_t"], lw["w_hh_t"], lw["b"]]
        lstm_in_specs += [
            pl.BlockSpec(lw["w_ih_t"].shape, lambda i: (0, 0), pipeline_mode=pl.Buffered(1)),
            pl.BlockSpec(lw["w_hh_t"].shape, lambda i: (0, 0), pipeline_mode=pl.Buffered(1)),
            pl.BlockSpec(lw["b"].shape, lambda i: (0, 0), pipeline_mode=pl.Buffered(1)),
        ]
        lstm_bytes += (lw["w_ih_t"].size + lw["w_hh_t"].size) * 2 + lw["b"].size * 4

    lstm_vmem_limit = min(max(int(1.3 * lstm_bytes) + (4 << 20), 16 << 20), vmem_hard_cap)

    h_new, c_new, x_final = pl.pallas_call(
        make_lstm_kernel(L, H, B),
        out_shape=(
            jax.ShapeDtypeStruct((L, B, H), jnp.float32),
            jax.ShapeDtypeStruct((L, B, H), jnp.float32),
            jax.ShapeDtypeStruct((B, H), jnp.float32),
        ),
        grid_spec=pltpu.PrefetchScalarGridSpec(
            num_scalar_prefetch=0,
            grid=(1,),
            in_specs=lstm_in_specs,
            out_specs=(
                pl.BlockSpec((L, B, H), lambda i: (0, 0, 0)),
                pl.BlockSpec((L, B, H), lambda i: (0, 0, 0)),
                pl.BlockSpec((B, H), lambda i: (0, 0)),
            ),
            scratch_shapes=[
                pltpu.VMEM((B, E), jnp.float32),       # gathered embedding rows
                pltpu.SemaphoreType.DMA((B,)),         # one semaphore per row DMA
            ],
        ),
        compiler_params=pltpu.CompilerParams(
            dimension_semantics=("arbitrary",),
            vmem_limit_bytes=lstm_vmem_limit,
        ),
        # hidden/cell are updated in place (inputs 2/3 -> outputs 0/1).
        input_output_aliases={2: 0, 3: 1},
    )(*lstm_inputs)

    # ------------------------------------------------ call 2: vocab projection (parallel axis)
    tile_v = _choose_tile_v(Vp, H, B, int(0.75 * vmem_cap))
    n_tiles = Vp // tile_v
    proj_bytes = 2 * (H * tile_v * 2 + tile_v * 4 + B * tile_v * 4) + B * H * 4
    proj_vmem_limit = min(max(proj_bytes + (4 << 20), 16 << 20), vmem_hard_cap)

    logits_p = pl.pallas_call(
        proj_kernel,
        out_shape=jax.ShapeDtypeStruct((B, Vp), jnp.float32),
        grid_spec=pltpu.PrefetchScalarGridSpec(
            num_scalar_prefetch=0,
            grid=(n_tiles,),
            in_specs=[
                pl.BlockSpec((B, H), lambda j: (0, 0), pipeline_mode=pl.Buffered(1)),
                pl.BlockSpec((H, tile_v), lambda j: (0, j)),     # streamed bf16 weight tile
                pl.BlockSpec((1, tile_v), lambda j: (0, j)),     # streamed bias tile
            ],
            out_specs=pl.BlockSpec((B, tile_v), lambda j: (0, j)),
        ),
        compiler_params=pltpu.CompilerParams(
            dimension_semantics=("parallel",),                   # vocab tiles are independent
            vmem_limit_bytes=proj_vmem_limit,
        ),
    )(x_final, prep["out_w_t"], prep["out_b"])

    logits = logits_p if Vp == vocab else logits_p[:, :vocab]
    return logits, h_new, c_new


# ----------------------------------------------------------------------------- references


def decoder_forward_ref(target, hidden, cell, params, *, num_layers, hidden_dim):
    """Pure-JAX f32 reference for correctness checking."""
    H = hidden_dim
    x = params["embedding"][target[:, 0]]
    h_new, c_new = [], []
    for l in range(num_layers):
        lw = params["lstm"][l]
        gates = x @ lw["w_ih"].T + hidden[l] @ lw["w_hh"].T + lw["b_ih"] + lw["b_hh"]
        i = jax.nn.sigmoid(gates[:, 0:H])
        f = jax.nn.sigmoid(gates[:, H:2 * H])
        g = jnp.tanh(gates[:, 2 * H:3 * H])
        o = jax.nn.sigmoid(gates[:, 3 * H:4 * H])
        c = f * cell[l] + i * g
        h = o * jnp.tanh(c)
        h_new.append(h)
        c_new.append(c)
        x = h
    logits = x @ params["out_w"].T + params["out_b"]
    return logits, jnp.stack(h_new), jnp.stack(c_new)


def _bf16_rounded_params(params):
    """Same params with weights rounded through bf16 (matches the kernel's weight precision)."""
    rp = {"embedding": params["embedding"],
          "out_w": params["out_w"].astype(jnp.bfloat16).astype(jnp.float32),
          "out_b": params["out_b"],
          "lstm": []}
    for lw in params["lstm"]:
        rp["lstm"].append({
            "w_ih": lw["w_ih"].astype(jnp.bfloat16).astype(jnp.float32),
            "w_hh": lw["w_hh"].astype(jnp.bfloat16).astype(jnp.float32),
            "b_ih": lw["b_ih"],
            "b_hh": lw["b_hh"],
        })
    return rp


# ----------------------------------------------------------------------------- main


if __name__ == "__main__":
    # Small, vreg-aligned shapes consistent with the module.
    output_dim = 1024   # vocab size (multiple of 128; single vocab tile for these shapes)
    emb_dim = 128
    hidden_dim = 128
    num_layers = 2
    batch = 8

    key = jax.random.PRNGKey(0)
    k_params, k_tgt, k_h, k_c = jax.random.split(key, 4)

    params = init_decoder_params(k_params, output_dim, emb_dim, hidden_dim, num_layers)
    prep = prepare_decoder_params(params)   # one-time weight prep (outside the decode step)

    target = jax.random.randint(k_tgt, (batch, 1), 0, output_dim, dtype=jnp.int32)
    hidden = jax.random.normal(k_h, (num_layers, batch, hidden_dim), jnp.float32)
    cell = jax.random.normal(k_c, (num_layers, batch, hidden_dim), jnp.float32)

    logits, h_new, c_new = decoder_forward(target, hidden, cell, prep, vocab=output_dim)
    jax.block_until_ready((logits, h_new, c_new))

    # Tight check: reference using bf16-rounded weights. NOTE: activations are also cast to
    # bf16 before each MXU matmul in the kernel, so this check bounds (weight + activation)
    # quantization error with the given tolerance rather than isolating weight rounding alone.
    rq = _bf16_rounded_params(params)
    q_logits, q_h, q_c = decoder_forward_ref(
        target, hidden, cell, rq, num_layers=num_layers, hidden_dim=hidden_dim)
    assert jnp.allclose(logits, q_logits, atol=2e-2, rtol=2e-2), \
        float(jnp.max(jnp.abs(logits - q_logits)))
    assert jnp.allclose(h_new, q_h, atol=2e-2, rtol=2e-2), \
        float(jnp.max(jnp.abs(h_new - q_h)))
    assert jnp.allclose(c_new, q_c, atol=2e-2, rtol=2e-2), \
        float(jnp.max(jnp.abs(c_new - q_c)))

    # Loose check against the full-precision (PyTorch-semantics) reference.
    ref_logits, ref_h, ref_c = decoder_forward_ref(
        target, hidden, cell, params, num_layers=num_layers, hidden_dim=hidden_dim)
    assert jnp.allclose(logits, ref_logits, atol=1.5e-1, rtol=1e-1)
    assert jnp.allclose(h_new, ref_h, atol=1.5e-1, rtol=1e-1)
    assert jnp.allclose(c_new, ref_c, atol=1.5e-1, rtol=1e-1)

    print("KERNEL_OK")
</pallas_src>

<mosaic_0001>
module attributes {stable_mosaic.version = 11 : i64} {
  func.func @proj_kernel(%arg0: i32, %arg1: memref<8x128xf32, #tpu.memory_space<vmem>>, %arg2: memref<128x1024xbf16, #tpu.memory_space<vmem>>, %arg3: memref<1x1024xf32, #tpu.memory_space<vmem>>, %arg4: memref<8x1024xf32, #tpu.memory_space<vmem>>) attributes {dimension_semantics = [#tpu.dimension_semantics<parallel>], iteration_bounds = array<i64: 1>, scalar_prefetch = 0 : i64, scratch_operands = 0 : i64, tpu.core_type = #tpu.core_type<tc>, window_params = [{pipeline_mode = #tpu.pipeline_mode<synchronous>, transform_indices = @transform_0, window_bounds = array<i64: 8, 128>}, {transform_indices = @transform_1, window_bounds = array<i64: 128, 1024>}, {transform_indices = @transform_2, window_bounds = array<i64: 1, 1024>}, {transform_indices = @transform_3, window_bounds = array<i64: 8, 1024>}]} {
    %c0 = arith.constant 0 : index
    %c0_0 = arith.constant 0 : index
    %0 = vector.load %arg1[%c0, %c0_0] : memref<8x128xf32, #tpu.memory_space<vmem>>, vector<8x128xf32>
    %1 = arith.truncf %0 : vector<8x128xf32> to vector<8x128xbf16>
    %c0_1 = arith.constant 0 : index
    %c0_2 = arith.constant 0 : index
    %2 = vector.load %arg2[%c0_1, %c0_2] : memref<128x1024xbf16, #tpu.memory_space<vmem>>, vector<128x1024xbf16>
    %cst = arith.constant dense<0.000000e+00> : vector<8x1024xf32>
    %3 = tpu.matmul %1, %2, %cst {dimension_numbers = #tpu.dot_dimension_numbers<[1], [0], [0], [1], [0, 0, 1, 1], [], []>} : vector<8x128xbf16>, vector<128x1024xbf16>, vector<8x1024xf32> -> vector<8x1024xf32>
    %c0_3 = arith.constant 0 : index
    %c0_4 = arith.constant 0 : index
    %4 = vector.load %arg3[%c0_3, %c0_4] : memref<1x1024xf32, #tpu.memory_space<vmem>>, vector<1x1024xf32>
    %5 = vector.broadcast %4 : vector<1x1024xf32> to vector<8x1024xf32>
    %6 = arith.addf %3, %5 : vector<8x1024xf32>
    %c0_5 = arith.constant 0 : index
    %c0_6 = arith.constant 0 : index
    %7 = vector.load %arg4[%c0_5, %c0_6] : memref<8x1024xf32, #tpu.memory_space<vmem>>, vector<8x1024xf32>
    tpu.vector_store %arg4[%c0_5, %c0_6], %6 {strides = array<i32>} : memref<8x1024xf32, #tpu.memory_space<vmem>>, vector<8x1024xf32>,
    return
  }
  func.func @transform_0(%arg0: i32) -> (i32, i32) {
    %c0_i32 = arith.constant 0 : i32
    %c0_i32_0 = arith.constant 0 : i32
    %c0_i32_1 = arith.constant 0 : i32
    return %c0_i32, %c0_i32_0 : i32, i32
  }
  func.func @transform_1(%arg0: i32) -> (i32, i32) {
    %c0_i32 = arith.constant 0 : i32
    %c0_i32_0 = arith.constant 0 : i32
    return %c0_i32, %arg0 : i32, i32
  }
  func.func @transform_2(%arg0: i32) -> (i32, i32) {
    %c0_i32 = arith.constant 0 : i32
    %c0_i32_0 = arith.constant 0 : i32
    return %c0_i32, %arg0 : i32, i32
  }
  func.func @transform_3(%arg0: i32) -> (i32, i32) {
    %c0_i32 = arith.constant 0 : i32
    %c0_i32_0 = arith.constant 0 : i32
    return %c0_i32, %arg0 : i32, i32
  }
}

module attributes {stable_mosaic.version = 11 : i64} {
  func.func @kernel(%arg0: i32, %arg1: memref<8xi32, #tpu.memory_space<smem>>, %arg2: memref<1024x128xf32, #tpu.memory_space<any>>, %arg3: memref<2x8x128xf32, #tpu.memory_space<vmem>>, %arg4: memref<2x8x128xf32, #tpu.memory_space<vmem>>, %arg5: memref<128x512xbf16, #tpu.memory_space<vmem>>, %arg6: memref<128x512xbf16, #tpu.memory_space<vmem>>, %arg7: memref<1x512xf32, #tpu.memory_space<vmem>>, %arg8: memref<128x512xbf16, #tpu.memory_space<vmem>>, %arg9: memref<128x512xbf16, #tpu.memory_space<vmem>>, %arg10: memref<1x512xf32, #tpu.memory_space<vmem>>, %arg11: memref<2x8x128xf32, #tpu.memory_space<vmem>>, %arg12: memref<2x8x128xf32, #tpu.memory_space<vmem>>, %arg13: memref<8x128xf32, #tpu.memory_space<vmem>>, %arg14: memref<8x128xf32, #tpu.memory_space<vmem>>, %arg15: memref<8x!tpu.dma_semaphore, #tpu.memory_space<semaphore_mem>>) attributes {dimension_semantics = [#tpu.dimension_semantics<arbitrary>], iteration_bounds = array<i64: 1>, scalar_prefetch = 0 : i64, scratch_operands = 2 : i64, tpu.core_type = #tpu.core_type<tc>, window_params = [{transform_indices = @transform_0, window_bounds = array<i64: 8>}, {}, {pipeline_mode = #tpu.pipeline_mode<synchronous>, transform_indices = @transform_2, window_bounds = array<i64: 2, 8, 128>}, {pipeline_mode = #tpu.pipeline_mode<synchronous>, transform_indices = @transform_3, window_bounds = array<i64: 2, 8, 128>}, {pipeline_mode = #tpu.pipeline_mode<synchronous>, transform_indices = @transform_4, window_bounds = array<i64: 128, 512>}, {pipeline_mode = #tpu.pipeline_mode<synchronous>, transform_indices = @transform_5, window_bounds = array<i64: 128, 512>}, {pipeline_mode = #tpu.pipeline_mode<synchronous>, transform_indices = @transform_6, window_bounds = array<i64: 1, 512>}, {pipeline_mode = #tpu.pipeline_mode<synchronous>, transform_indices = @transform_7, window_bounds = array<i64: 128, 512>}, {pipeline_mode = #tpu.pipeline_mode<synchronous>, transform_indices = @transform_8, window_bounds = array<i64: 128, 512>}, {pipeline_mode = #tpu.pipeline_mode<synchronous>, transform_indices = @transform_9, window_bounds = array<i64: 1, 512>}, {pipeline_mode = #tpu.pipeline_mode<synchronous>, transform_indices = @transform_10, window_bounds = array<i64: 2, 8, 128>}, {pipeline_mode = #tpu.pipeline_mode<synchronous>, transform_indices = @transform_11, window_bounds = array<i64: 2, 8, 128>}, {pipeline_mode = #tpu.pipeline_mode<synchronous>, transform_indices = @transform_12, window_bounds = array<i64: 8, 128>}]} {
    %c0 = arith.constant 0 : index
    %0 = memref.load %arg1[%c0] : memref<8xi32, #tpu.memory_space<smem>>
    %c0_i32 = arith.constant 0 : i32
    %c0_i32_0 = arith.constant 0 : i32
    %1 = tpu.memref_slice %arg2[%0, %c0_i32_0] : memref<1024x128xf32, #tpu.memory_space<any>> -> memref<1x128xf32, #tpu.memory_space<any>>
    %c0_i32_1 = arith.constant 0 : i32
    %c0_i32_2 = arith.constant 0 : i32
    %2 = tpu.memref_slice %arg14[%c0_i32_1, %c0_i32_2] : memref<8x128xf32, #tpu.memory_space<vmem>> -> memref<1x128xf32, #tpu.memory_space<vmem>>
    %3 = tpu.memref_slice %arg15[%c0_i32] : memref<8x!tpu.dma_semaphore, #tpu.memory_space<semaphore_mem>> -> memref<1x!tpu.dma_semaphore, #tpu.memory_space<semaphore_mem>>
    %4 = tpu.memref_squeeze %3 : memref<1x!tpu.dma_semaphore, #tpu.memory_space<semaphore_mem>> -> memref<!tpu.dma_semaphore, #tpu.memory_space<semaphore_mem>>
    tpu.enqueue_dma source(%1 : memref<1x128xf32, #tpu.memory_space<any>>) target(%2 : memref<1x128xf32, #tpu.memory_space<vmem>>) target_semaphore(%4 : memref<!tpu.dma_semaphore, #tpu.memory_space<semaphore_mem>>)
    %c1 = arith.constant 1 : index
    %5 = memref.load %arg1[%c1] : memref<8xi32, #tpu.memory_space<smem>>
    %c1_i32 = arith.constant 1 : i32
    %c0_i32_3 = arith.constant 0 : i32
    %6 = tpu.memref_slice %arg2[%5, %c0_i32_3] : memref<1024x128xf32, #tpu.memory_space<any>> -> memref<1x128xf32, #tpu.memory_space<any>>
    %c1_i32_4 = arith.constant 1 : i32
    %c0_i32_5 = arith.constant 0 : i32
    %7 = tpu.memref_slice %arg14[%c1_i32_4, %c0_i32_5] : memref<8x128xf32, #tpu.memory_space<vmem>> -> memref<1x128xf32, #tpu.memory_space<vmem>>
    %8 = tpu.memref_slice %arg15[%c1_i32] : memref<8x!tpu.dma_semaphore, #tpu.memory_space<semaphore_mem>> -> memref<1x!tpu.dma_semaphore, #tpu.memory_space<semaphore_mem>>
    %9 = tpu.memref_squeeze %8 : memref<1x!tpu.dma_semaphore, #tpu.memory_space<semaphore_mem>> -> memref<!tpu.dma_semaphore, #tpu.memory_space<semaphore_mem>>
    tpu.enqueue_dma source(%6 : memref<1x128xf32, #tpu.memory_space<any>>) target(%7 : memref<1x128xf32, #tpu.memory_space<vmem>>) target_semaphore(%9 : memref<!tpu.dma_semaphore, #tpu.memory_space<semaphore_mem>>)
    %c2 = arith.constant 2 : index
    %10 = memref.load %arg1[%c2] : memref<8xi32, #tpu.memory_space<smem>>
    %c2_i32 = arith.constant 2 : i32
    %c0_i32_6 = arith.constant 0 : i32
    %11 = tpu.memref_slice %arg2[%10, %c0_i32_6] : memref<1024x128xf32, #tpu.memory_space<any>> -> memref<1x128xf32, #tpu.memory_space<any>>
    %c2_i32_7 = arith.constant 2 : i32
    %c0_i32_8 = arith.constant 0 : i32
    %12 = tpu.memref_slice %arg14[%c2_i32_7, %c0_i32_8] : memref<8x128xf32, #tpu.memory_space<vmem>> -> memref<1x128xf32, #tpu.memory_space<vmem>>
    %13 = tpu.memref_slice %arg15[%c2_i32] : memref<8x!tpu.dma_semaphore, #tpu.memory_space<semaphore_mem>> -> memref<1x!tpu.dma_semaphore, #tpu.memory_space<semaphore_mem>>
    %14 = tpu.memref_squeeze %13 : memref<1x!tpu.dma_semaphore, #tpu.memory_space<semaphore_mem>> -> memref<!tpu.dma_semaphore, #tpu.memory_space<semaphore_mem>>
    tpu.enqueue_dma source(%11 : memref<1x128xf32, #tpu.memory_space<any>>) target(%12 : memref<1x128xf32, #tpu.memory_space<vmem>>) target_semaphore(%14 : memref<!tpu.dma_semaphore, #tpu.memory_space<semaphore_mem>>)
    %c3 = arith.constant 3 : index
    %15 = memref.load %arg1[%c3] : memref<8xi32, #tpu.memory_space<smem>>
    %c3_i32 = arith.constant 3 : i32
    %c0_i32_9 = arith.constant 0 : i32
    %16 = tpu.memref_slice %arg2[%15, %c0_i32_9] : memref<1024x128xf32, #tpu.memory_space<any>> -> memref<1x128xf32, #tpu.memory_space<any>>
    %c3_i32_10 = arith.constant 3 : i32
    %c0_i32_11 = arith.constant 0 : i32
    %17 = tpu.memref_slice %arg14[%c3_i32_10, %c0_i32_11] : memref<8x128xf32, #tpu.memory_space<vmem>> -> memref<1x128xf32, #tpu.memory_space<vmem>>
    %18 = tpu.memref_slice %arg15[%c3_i32] : memref<8x!tpu.dma_semaphore, #tpu.memory_space<semaphore_mem>> -> memref<1x!tpu.dma_semaphore, #tpu.memory_space<semaphore_mem>>
    %19 = tpu.memref_squeeze %18 : memref<1x!tpu.dma_semaphore, #tpu.memory_space<semaphore_mem>> -> memref<!tpu.dma_semaphore, #tpu.memory_space<semaphore_mem>>
    tpu.enqueue_dma source(%16 : memref<1x128xf32, #tpu.memory_space<any>>) target(%17 : memref<1x128xf32, #tpu.memory_space<vmem>>) target_semaphore(%19 : memref<!tpu.dma_semaphore, #tpu.memory_space<semaphore_mem>>)
    %c4 = arith.constant 4 : index
    %20 = memref.load %arg1[%c4] : memref<8xi32, #tpu.memory_space<smem>>
    %c4_i32 = arith.constant 4 : i32
    %c0_i32_12 = arith.constant 0 : i32
    %21 = tpu.memref_slice %arg2[%20, %c0_i32_12] : memref<1024x128xf32, #tpu.memory_space<any>> -> memref<1x128xf32, #tpu.memory_space<any>>
    %c4_i32_13 = arith.constant 4 : i32
    %c0_i32_14 = arith.constant 0 : i32
    %22 = tpu.memref_slice %arg14[%c4_i32_13, %c0_i32_14] : memref<8x128xf32, #tpu.memory_space<vmem>> -> memref<1x128xf32, #tpu.memory_space<vmem>>
    %23 = tpu.memref_slice %arg15[%c4_i32] : memref<8x!tpu.dma_semaphore, #tpu.memory_space<semaphore_mem>> -> memref<1x!tpu.dma_semaphore, #tpu.memory_space<semaphore_mem>>
    %24 = tpu.memref_squeeze %23 : memref<1x!tpu.dma_semaphore, #tpu.memory_space<semaphore_mem>> -> memref<!tpu.dma_semaphore, #tpu.memory_space<semaphore_mem>>
    tpu.enqueue_dma source(%21 : memref<1x128xf32, #tpu.memory_space<any>>) target(%22 : memref<1x128xf32, #tpu.memory_space<vmem>>) target_semaphore(%24 : memref<!tpu.dma_semaphore, #tpu.memory_space<semaphore_mem>>)
    %c5 = arith.constant 5 : index
    %25 = memref.load %arg1[%c5] : memref<8xi32, #tpu.memory_space<smem>>
    %c5_i32 = arith.constant 5 : i32
    %c0_i32_15 = arith.constant 0 : i32
    %26 = tpu.memref_slice %arg2[%25, %c0_i32_15] : memref<1024x128xf32, #tpu.memory_space<any>> -> memref<1x128xf32, #tpu.memory_space<any>>
    %c5_i32_16 = arith.constant 5 : i32
    %c0_i32_17 = arith.constant 0 : i32
    %27 = tpu.memref_slice %arg14[%c5_i32_16, %c0_i32_17] : memref<8x128xf32, #tpu.memory_space<vmem>> -> memref<1x128xf32, #tpu.memory_space<vmem>>
    %28 = tpu.memref_slice %arg15[%c5_i32] : memref<8x!tpu.dma_semaphore, #tpu.memory_space<semaphore_mem>> -> memref<1x!tpu.dma_semaphore, #tpu.memory_space<semaphore_mem>>
    %29 = tpu.memref_squeeze %28 : memref<1x!tpu.dma_semaphore, #tpu.memory_space<semaphore_mem>> -> memref<!tpu.dma_semaphore, #tpu.memory_space<semaphore_mem>>
    tpu.enqueue_dma source(%26 : memref<1x128xf32, #tpu.memory_space<any>>) target(%27 : memref<1x128xf32, #tpu.memory_space<vmem>>) target_semaphore(%29 : memref<!tpu.dma_semaphore, #tpu.memory_space<semaphore_mem>>)
    %c6 = arith.constant 6 : index
    %30 = memref.load %arg1[%c6] : memref<8xi32, #tpu.memory_space<smem>>
    %c6_i32 = arith.constant 6 : i32
    %c0_i32_18 = arith.constant 0 : i32
    %31 = tpu.memref_slice %arg2[%30, %c0_i32_18] : memref<1024x128xf32, #tpu.memory_space<any>> -> memref<1x128xf32, #tpu.memory_space<any>>
    %c6_i32_19 = arith.constant 6 : i32
    %c0_i32_20 = arith.constant 0 : i32
    %32 = tpu.memref_slice %arg14[%c6_i32_19, %c0_i32_20] : memref<8x128xf32, #tpu.memory_space<vmem>> -> memref<1x128xf32, #tpu.memory_space<vmem>>
    %33 = tpu.memref_slice %arg15[%c6_i32] : memref<8x!tpu.dma_semaphore, #tpu.memory_space<semaphore_mem>> -> memref<1x!tpu.dma_semaphore, #tpu.memory_space<semaphore_mem>>
    %34 = tpu.memref_squeeze %33 : memref<1x!tpu.dma_semaphore, #tpu.memory_space<semaphore_mem>> -> memref<!tpu.dma_semaphore, #tpu.memory_space<semaphore_mem>>
    tpu.enqueue_dma source(%31 : memref<1x128xf32, #tpu.memory_space<any>>) target(%32 : memref<1x128xf32, #tpu.memory_space<vmem>>) target_semaphore(%34 : memref<!tpu.dma_semaphore, #tpu.memory_space<semaphore_mem>>)
    %c7 = arith.constant 7 : index
    %35 = memref.load %arg1[%c7] : memref<8xi32, #tpu.memory_space<smem>>
    %c7_i32 = arith.constant 7 : i32
    %c0_i32_21 = arith.constant 0 : i32
    %36 = tpu.memref_slice %arg2[%35, %c0_i32_21] : memref<1024x128xf32, #tpu.memory_space<any>> -> memref<1x128xf32, #tpu.memory_space<any>>
    %c7_i32_22 = arith.constant 7 : i32
    %c0_i32_23 = arith.constant 0 : i32
    %37 = tpu.memref_slice %arg14[%c7_i32_22, %c0_i32_23] : memref<8x128xf32, #tpu.memory_space<vmem>> -> memref<1x128xf32, #tpu.memory_space<vmem>>
    %38 = tpu.memref_slice %arg15[%c7_i32] : memref<8x!tpu.dma_semaphore, #tpu.memory_space<semaphore_mem>> -> memref<1x!tpu.dma_semaphore, #tpu.memory_space<semaphore_mem>>
    %39 = tpu.memref_squeeze %38 : memref<1x!tpu.dma_semaphore, #tpu.memory_space<semaphore_mem>> -> memref<!tpu.dma_semaphore, #tpu.memory_space<semaphore_mem>>
    tpu.enqueue_dma source(%36 : memref<1x128xf32, #tpu.memory_space<any>>) target(%37 : memref<1x128xf32, #tpu.memory_space<vmem>>) target_semaphore(%39 : memref<!tpu.dma_semaphore, #tpu.memory_space<semaphore_mem>>)
    %c0_i32_24 = arith.constant 0 : i32
    %c0_i32_25 = arith.constant 0 : i32
    %40 = tpu.memref_slice %arg2[%0, %c0_i32_25] : memref<1024x128xf32, #tpu.memory_space<any>> -> memref<1x128xf32, #tpu.memory_space<any>>
    %c0_i32_26 = arith.constant 0 : i32
    %c0_i32_27 = arith.constant 0 : i32
    %41 = tpu.memref_slice %arg14[%c0_i32_26, %c0_i32_27] : memref<8x128xf32, #tpu.memory_space<vmem>> -> memref<1x128xf32, #tpu.memory_space<vmem>>
    %42 = tpu.memref_slice %arg15[%c0_i32_24] : memref<8x!tpu.dma_semaphore, #tpu.memory_space<semaphore_mem>> -> memref<1x!tpu.dma_semaphore, #tpu.memory_space<semaphore_mem>>
    %43 = tpu.memref_squeeze %42 : memref<1x!tpu.dma_semaphore, #tpu.memory_space<semaphore_mem>> -> memref<!tpu.dma_semaphore, #tpu.memory_space<semaphore_mem>>
    tpu.wait_dma2 semaphore(%43 : memref<!tpu.dma_semaphore, #tpu.memory_space<semaphore_mem>>) src(%40 : memref<1x128xf32, #tpu.memory_space<any>>) dst(%41 : memref<1x128xf32, #tpu.memory_space<vmem>>)
    %c1_i32_28 = arith.constant 1 : i32
    %c0_i32_29 = arith.constant 0 : i32
    %44 = tpu.memref_slice %arg2[%5, %c0_i32_29] : memref<1024x128xf32, #tpu.memory_space<any>> -> memref<1x128xf32, #tpu.memory_space<any>>
    %c1_i32_30 = arith.constant 1 : i32
    %c0_i32_31 = arith.constant 0 : i32
    %45 = tpu.memref_slice %arg14[%c1_i32_30, %c0_i32_31] : memref<8x128xf32, #tpu.memory_space<vmem>> -> memref<1x128xf32, #tpu.memory_space<vmem>>
    %46 = tpu.memref_slice %arg15[%c1_i32_28] : memref<8x!tpu.dma_semaphore, #tpu.memory_space<semaphore_mem>> -> memref<1x!tpu.dma_semaphore, #tpu.memory_space<semaphore_mem>>
    %47 = tpu.memref_squeeze %46 : memref<1x!tpu.dma_semaphore, #tpu.memory_space<semaphore_mem>> -> memref<!tpu.dma_semaphore, #tpu.memory_space<semaphore_mem>>
    tpu.wait_dma2 semaphore(%47 : memref<!tpu.dma_semaphore, #tpu.memory_space<semaphore_mem>>) src(%44 : memref<1x128xf32, #tpu.memory_space<any>>) dst(%45 : memref<1x128xf32, #tpu.memory_space<vmem>>)
    %c2_i32_32 = arith.constant 2 : i32
    %c0_i32_33 = arith.constant 0 : i32
    %48 = tpu.memref_slice %arg2[%10, %c0_i32_33] : memref<1024x128xf32, #tpu.memory_space<any>> -> memref<1x128xf32, #tpu.memory_space<any>>
    %c2_i32_34 = arith.constant 2 : i32
    %c0_i32_35 = arith.constant 0 : i32
    %49 = tpu.memref_slice %arg14[%c2_i32_34, %c0_i32_35] : memref<8x128xf32, #tpu.memory_space<vmem>> -> memref<1x128xf32, #tpu.memory_space<vmem>>
    %50 = tpu.memref_slice %arg15[%c2_i32_32] : memref<8x!tpu.dma_semaphore, #tpu.memory_space<semaphore_mem>> -> memref<1x!tpu.dma_semaphore, #tpu.memory_space<semaphore_mem>>
    %51 = tpu.memref_squeeze %50 : memref<1x!tpu.dma_semaphore, #tpu.memory_space<semaphore_mem>> -> memref<!tpu.dma_semaphore, #tpu.memory_space<semaphore_mem>>
    tpu.wait_dma2 semaphore(%51 : memref<!tpu.dma_semaphore, #tpu.memory_space<semaphore_mem>>) src(%48 : memref<1x128xf32, #tpu.memory_space<any>>) dst(%49 : memref<1x128xf32, #tpu.memory_space<vmem>>)
    %c3_i32_36 = arith.constant 3 : i32
    %c0_i32_37 = arith.constant 0 : i32
    %52 = tpu.memref_slice %arg2[%15, %c0_i32_37] : memref<1024x128xf32, #tpu.memory_space<any>> -> memref<1x128xf32, #tpu.memory_space<any>>
    %c3_i32_38 = arith.constant 3 : i32
    %c0_i32_39 = arith.constant 0 : i32
    %53 = tpu.memref_slice %arg14[%c3_i32_38, %c0_i32_39] : memref<8x128xf32, #tpu.memory_space<vmem>> -> memref<1x128xf32, #tpu.memory_space<vmem>>
    %54 = tpu.memref_slice %arg15[%c3_i32_36] : memref<8x!tpu.dma_semaphore, #tpu.memory_space<semaphore_mem>> -> memref<1x!tpu.dma_semaphore, #tpu.memory_space<semaphore_mem>>
    %55 = tpu.memref_squeeze %54 : memref<1x!tpu.dma_semaphore, #tpu.memory_space<semaphore_mem>> -> memref<!tpu.dma_semaphore, #tpu.memory_space<semaphore_mem>>
    tpu.wait_dma2 semaphore(%55 : memref<!tpu.dma_semaphore, #tpu.memory_space<semaphore_mem>>) src(%52 : memref<1x128xf32, #tpu.memory_space<any>>) dst(%53 : memref<1x128xf32, #tpu.memory_space<vmem>>)
    %c4_i32_40 = arith.constant 4 : i32
    %c0_i32_41 = arith.constant 0 : i32
    %56 = tpu.memref_slice %arg2[%20, %c0_i32_41] : memref<1024x128xf32, #tpu.memory_space<any>> -> memref<1x128xf32, #tpu.memory_space<any>>
    %c4_i32_42 = arith.constant 4 : i32
    %c0_i32_43 = arith.constant 0 : i32
    %57 = tpu.memref_slice %arg14[%c4_i32_42, %c0_i32_43] : memref<8x128xf32, #tpu.memory_space<vmem>> -> memref<1x128xf32, #tpu.memory_space<vmem>>
    %58 = tpu.memref_slice %arg15[%c4_i32_40] : memref<8x!tpu.dma_semaphore, #tpu.memory_space<semaphore_mem>> -> memref<1x!tpu.dma_semaphore, #tpu.memory_space<semaphore_mem>>
    %59 = tpu.memref_squeeze %58 : memref<1x!tpu.dma_semaphore, #tpu.memory_space<semaphore_mem>> -> memref<!tpu.dma_semaphore, #tpu.memory_space<semaphore_mem>>
    tpu.wait_dma2 semaphore(%59 : memref<!tpu.dma_semaphore, #tpu.memory_space<semaphore_mem>>) src(%56 : memref<1x128xf32, #tpu.memory_space<any>>) dst(%57 : memref<1x128xf32, #tpu.memory_space<vmem>>)
    %c5_i32_44 = arith.constant 5 : i32
    %c0_i32_45 = arith.constant 0 : i32
    %60 = tpu.memref_slice %arg2[%25, %c0_i32_45] : memref<1024x128xf32, #tpu.memory_space<any>> -> memref<1x128xf32, #tpu.memory_space<any>>
    %c5_i32_46 = arith.constant 5 : i32
    %c0_i32_47 = arith.constant 0 : i32
    %61 = tpu.memref_slice %arg14[%c5_i32_46, %c0_i32_47] : memref<8x128xf32, #tpu.memory_space<vmem>> -> memref<1x128xf32, #tpu.memory_space<vmem>>
    %62 = tpu.memref_slice %arg15[%c5_i32_44] : memref<8x!tpu.dma_semaphore, #tpu.memory_space<semaphore_mem>> -> memref<1x!tpu.dma_semaphore, #tpu.memory_space<semaphore_mem>>
    %63 = tpu.memref_squeeze %62 : memref<1x!tpu.dma_semaphore, #tpu.memory_space<semaphore_mem>> -> memref<!tpu.dma_semaphore, #tpu.memory_space<semaphore_mem>>
    tpu.wait_dma2 semaphore(%63 : memref<!tpu.dma_semaphore, #tpu.memory_space<semaphore_mem>>) src(%60 : memref<1x128xf32, #tpu.memory_space<any>>) dst(%61 : memref<1x128xf32, #tpu.memory_space<vmem>>)
    %c6_i32_48 = arith.constant 6 : i32
    %c0_i32_49 = arith.constant 0 : i32
    %64 = tpu.memref_slice %arg2[%30, %c0_i32_49] : memref<1024x128xf32, #tpu.memory_space<any>> -> memref<1x128xf32, #tpu.memory_space<any>>
    %c6_i32_50 = arith.constant 6 : i32
    %c0_i32_51 = arith.constant 0 : i32
    %65 = tpu.memref_slice %arg14[%c6_i32_50, %c0_i32_51] : memref<8x128xf32, #tpu.memory_space<vmem>> -> memref<1x128xf32, #tpu.memory_space<vmem>>
    %66 = tpu.memref_slice %arg15[%c6_i32_48] : memref<8x!tpu.dma_semaphore, #tpu.memory_space<semaphore_mem>> -> memref<1x!tpu.dma_semaphore, #tpu.memory_space<semaphore_mem>>
    %67 = tpu.memref_squeeze %66 : memref<1x!tpu.dma_semaphore, #tpu.memory_space<semaphore_mem>> -> memref<!tpu.dma_semaphore, #tpu.memory_space<semaphore_mem>>
    tpu.wait_dma2 semaphore(%67 : memref<!tpu.dma_semaphore, #tpu.memory_space<semaphore_mem>>) src(%64 : memref<1x128xf32, #tpu.memory_space<any>>) dst(%65 : memref<1x128xf32, #tpu.memory_space<vmem>>)
    %c7_i32_52 = arith.constant 7 : i32
    %c0_i32_53 = arith.constant 0 : i32
    %68 = tpu.memref_slice %arg2[%35, %c0_i32_53] : memref<1024x128xf32, #tpu.memory_space<any>> -> memref<1x128xf32, #tpu.memory_space<any>>
    %c7_i32_54 = arith.constant 7 : i32
    %c0_i32_55 = arith.constant 0 : i32
    %69 = tpu.memref_slice %arg14[%c7_i32_54, %c0_i32_55] : memref<8x128xf32, #tpu.memory_space<vmem>> -> memref<1x128xf32, #tpu.memory_space<vmem>>
    %70 = tpu.memref_slice %arg15[%c7_i32_52] : memref<8x!tpu.dma_semaphore, #tpu.memory_space<semaphore_mem>> -> memref<1x!tpu.dma_semaphore, #tpu.memory_space<semaphore_mem>>
    %71 = tpu.memref_squeeze %70 : memref<1x!tpu.dma_semaphore, #tpu.memory_space<semaphore_mem>> -> memref<!tpu.dma_semaphore, #tpu.memory_space<semaphore_mem>>
    tpu.wait_dma2 semaphore(%71 : memref<!tpu.dma_semaphore, #tpu.memory_space<semaphore_mem>>) src(%68 : memref<1x128xf32, #tpu.memory_space<any>>) dst(%69 : memref<1x128xf32, #tpu.memory_space<vmem>>)
    %c0_56 = arith.constant 0 : index
    %c0_57 = arith.constant 0 : index
    %72 = vector.load %arg14[%c0_56, %c0_57] : memref<8x128xf32, #tpu.memory_space<vmem>>, vector<8x128xf32>
    %c0_58 = arith.constant 0 : index
    %c0_59 = arith.constant 0 : index
    %73 = vector.load %arg5[%c0_58, %c0_59] : memref<128x512xbf16, #tpu.memory_space<vmem>>, vector<128x512xbf16>
    %c0_60 = arith.constant 0 : index
    %c0_61 = arith.constant 0 : index
    %74 = vector.load %arg6[%c0_60, %c0_61] : memref<128x512xbf16, #tpu.memory_space<vmem>>, vector<128x512xbf16>
    %c0_62 = arith.constant 0 : index
    %c0_63 = arith.constant 0 : index
    %75 = vector.load %arg7[%c0_62, %c0_63] : memref<1x512xf32, #tpu.memory_space<vmem>>, vector<1x512xf32>
    %c0_64 = arith.constant 0 : index
    %c0_65 = arith.constant 0 : index
    %c0_66 = arith.constant 0 : index
    %76 = vector.load %arg3[%c0_64, %c0_65, %c0_66] : memref<2x8x128xf32, #tpu.memory_space<vmem>>, vector<1x8x128xf32>
    %77 = vector.shape_cast %76 : vector<1x8x128xf32> to vector<8x128xf32>
    %c0_67 = arith.constant 0 : index
    %c0_68 = arith.constant 0 : index
    %c0_69 = arith.constant 0 : index
    %78 = vector.load %arg4[%c0_67, %c0_68, %c0_69] : memref<2x8x128xf32, #tpu.memory_space<vmem>>, vector<1x8x128xf32>
    %79 = vector.shape_cast %78 : vector<1x8x128xf32> to vector<8x128xf32>
    %80 = arith.truncf %72 : vector<8x128xf32> to vector<8x128xbf16>
    %cst = arith.constant dense<0.000000e+00> : vector<8x512xf32>
    %81 = tpu.matmul %80, %73, %cst {dimension_numbers = #tpu.dot_dimension_numbers<[1], [0], [0], [1], [0, 0, 1, 1], [], []>} : vector<8x128xbf16>, vector<128x512xbf16>, vector<8x512xf32> -> vector<8x512xf32>
    %82 = arith.truncf %77 : vector<8x128xf32> to vector<8x128xbf16>
    %cst_70 = arith.constant dense<0.000000e+00> : vector<8x512xf32>
    %83 = tpu.matmul %82, %74, %cst_70 {dimension_numbers = #tpu.dot_dimension_numbers<[1], [0], [0], [1], [0, 0, 1, 1], [], []>} : vector<8x128xbf16>, vector<128x512xbf16>, vector<8x512xf32> -> vector<8x512xf32>
    %84 = arith.addf %81, %83 : vector<8x512xf32>
    %85 = vector.broadcast %75 : vector<1x512xf32> to vector<8x512xf32>
    %86 = arith.addf %84, %85 : vector<8x512xf32>
    %87 = vector.extract_strided_slice %86 {offsets = [0, 0], sizes = [8, 128], strides = [1, 1]} : vector<8x512xf32> to vector<8x128xf32>
    %88 = arith.negf %87 : vector<8x128xf32>
    %89 = math.exp %88 : vector<8x128xf32>
    %cst_71 = arith.constant 1.000000e+00 : f32
    %90 = vector.broadcast %cst_71 : f32 to vector<8x128xf32>
    %91 = arith.addf %90, %89 : vector<8x128xf32>
    %92 = arith.divf %90, %91 : vector<8x128xf32>
    %93 = vector.extract_strided_slice %86 {offsets = [0, 128], sizes = [8, 128], strides = [1, 1]} : vector<8x512xf32> to vector<8x128xf32>
    %94 = arith.negf %93 : vector<8x128xf32>
    %95 = math.exp %94 : vector<8x128xf32>
    %cst_72 = arith.constant 1.000000e+00 : f32
    %96 = vector.broadcast %cst_72 : f32 to vector<8x128xf32>
    %97 = arith.addf %96, %95 : vector<8x128xf32>
    %98 = arith.divf %96, %97 : vector<8x128xf32>
    %99 = vector.extract_strided_slice %86 {offsets = [0, 256], sizes = [8, 128], strides = [1, 1]} : vector<8x512xf32> to vector<8x128xf32>
    %100 = math.tanh %99 : vector<8x128xf32>
    %101 = vector.extract_strided_slice %86 {offsets = [0, 384], sizes = [8, 128], strides = [1, 1]} : vector<8x512xf32> to vector<8x128xf32>
    %102 = arith.negf %101 : vector<8x128xf32>
    %103 = math.exp %102 : vector<8x128xf32>
    %cst_73 = arith.constant 1.000000e+00 : f32
    %104 = vector.broadcast %cst_73 : f32 to vector<8x128xf32>
    %105 = arith.addf %104, %103 : vector<8x128xf32>
    %106 = arith.divf %104, %105 : vector<8x128xf32>
    %107 = arith.mulf %98, %79 : vector<8x128xf32>
    %108 = arith.mulf %92, %100 : vector<8x128xf32>
    %109 = arith.addf %107, %108 : vector<8x128xf32>
    %110 = math.tanh %109 : vector<8x128xf32>
    %111 = arith.mulf %106, %110 : vector<8x128xf32>
    %c0_74 = arith.constant 0 : index
    %c0_75 = arith.constant 0 : index
    %c0_76 = arith.constant 0 : index
    %112 = vector.load %arg11[%c0_74, %c0_75, %c0_76] : memref<2x8x128xf32, #tpu.memory_space<vmem>>, vector<1x8x128xf32>
    %113 = vector.shape_cast %112 : vector<1x8x128xf32> to vector<8x128xf32>
    %114 = vector.shape_cast %111 : vector<8x128xf32> to vector<1x8x128xf32>
    tpu.vector_store %arg11[%c0_74, %c0_75, %c0_76], %114 {strides = array<i32>} : memref<2x8x128xf32, #tpu.memory_space<vmem>>, vector<1x8x128xf32>,
    %c0_77 = arith.constant 0 : index
    %c0_78 = arith.constant 0 : index
    %c0_79 = arith.constant 0 : index
    %115 = vector.load %arg12[%c0_77, %c0_78, %c0_79] : memref<2x8x128xf32, #tpu.memory_space<vmem>>, vector<1x8x128xf32>
    %116 = vector.shape_cast %115 : vector<1x8x128xf32> to vector<8x128xf32>
    %117 = vector.shape_cast %109 : vector<8x128xf32> to vector<1x8x128xf32>
    tpu.vector_store %arg12[%c0_77, %c0_78, %c0_79], %117 {strides = array<i32>} : memref<2x8x128xf32, #tpu.memory_space<vmem>>, vector<1x8x128xf32>,
    %c0_80 = arith.constant 0 : index
    %c0_81 = arith.constant 0 : index
    %118 = vector.load %arg8[%c0_80, %c0_81] : memref<128x512xbf16, #tpu.memory_space<vmem>>, vector<128x512xbf16>
    %c0_82 = arith.constant 0 : index
    %c0_83 = arith.constant 0 : index
    %119 = vector.load %arg9[%c0_82, %c0_83] : memref<128x512xbf16, #tpu.memory_space<vmem>>, vector<128x512xbf16>
    %c0_84 = arith.constant 0 : index
    %c0_85 = arith.constant 0 : index
    %120 = vector.load %arg10[%c0_84, %c0_85] : memref<1x512xf32, #tpu.memory_space<vmem>>, vector<1x512xf32>
    %c1_86 = arith.constant 1 : index
    %c0_87 = arith.constant 0 : index
    %c0_88 = arith.constant 0 : index
    %121 = vector.load %arg3[%c1_86, %c0_87, %c0_88] : memref<2x8x128xf32, #tpu.memory_space<vmem>>, vector<1x8x128xf32>
    %122 = vector.shape_cast %121 : vector<1x8x128xf32> to vector<8x128xf32>
    %c1_89 = arith.constant 1 : index
    %c0_90 = arith.constant 0 : index
    %c0_91 = arith.constant 0 : index
    %123 = vector.load %arg4[%c1_89, %c0_90, %c0_91] : memref<2x8x128xf32, #tpu.memory_space<vmem>>, vector<1x8x128xf32>
    %124 = vector.shape_cast %123 : vector<1x8x128xf32> to vector<8x128xf32>
    %125 = arith.truncf %111 : vector<8x128xf32> to vector<8x128xbf16>
    %cst_92 = arith.constant dense<0.000000e+00> : vector<8x512xf32>
    %126 = tpu.matmul %125, %118, %cst_92 {dimension_numbers = #tpu.dot_dimension_numbers<[1], [0], [0], [1], [0, 0, 1, 1], [], []>} : vector<8x128xbf16>, vector<128x512xbf16>, vector<8x512xf32> -> vector<8x512xf32>
    %127 = arith.truncf %122 : vector<8x128xf32> to vector<8x128xbf16>
    %cst_93 = arith.constant dense<0.000000e+00> : vector<8x512xf32>
    %128 = tpu.matmul %127, %119, %cst_93 {dimension_numbers = #tpu.dot_dimension_numbers<[1], [0], [0], [1], [0, 0, 1, 1], [], []>} : vector<8x128xbf16>, vector<128x512xbf16>, vector<8x512xf32> -> vector<8x512xf32>
    %129 = arith.addf %126, %128 : vector<8x512xf32>
    %130 = vector.broadcast %120 : vector<1x512xf32> to vector<8x512xf32>
    %131 = arith.addf %129, %130 : vector<8x512xf32>
    %132 = vector.extract_strided_slice %131 {offsets = [0, 0], sizes = [8, 128], strides = [1, 1]} : vector<8x512xf32> to vector<8x128xf32>
    %133 = arith.negf %132 : vector<8x128xf32>
    %134 = math.exp %133 : vector<8x128xf32>
    %cst_94 = arith.constant 1.000000e+00 : f32
    %135 = vector.broadcast %cst_94 : f32 to vector<8x128xf32>
    %136 = arith.addf %135, %134 : vector<8x128xf32>
    %137 = arith.divf %135, %136 : vector<8x128xf32>
    %138 = vector.extract_strided_slice %131 {offsets = [0, 128], sizes = [8, 128], strides = [1, 1]} : vector<8x512xf32> to vector<8x128xf32>
    %139 = arith.negf %138 : vector<8x128xf32>
    %140 = math.exp %139 : vector<8x128xf32>
    %cst_95 = arith.constant 1.000000e+00 : f32
    %141 = vector.broadcast %cst_95 : f32 to vector<8x128xf32>
    %142 = arith.addf %141, %140 : vector<8x128xf32>
    %143 = arith.divf %141, %142 : vector<8x128xf32>
    %144 = vector.extract_strided_slice %131 {offsets = [0, 256], sizes = [8, 128], strides = [1, 1]} : vector<8x512xf32> to vector<8x128xf32>
    %145 = math.tanh %144 : vector<8x128xf32>
    %146 = vector.extract_strided_slice %131 {offsets = [0, 384], sizes = [8, 128], strides = [1, 1]} : vector<8x512xf32> to vector<8x128xf32>
    %147 = arith.negf %146 : vector<8x128xf32>
    %148 = math.exp %147 : vector<8x128xf32>
    %cst_96 = arith.constant 1.000000e+00 : f32
    %149 = vector.broadcast %cst_96 : f32 to vector<8x128xf32>
    %150 = arith.addf %149, %148 : vector<8x128xf32>
    %151 = arith.divf %149, %150 : vector<8x128xf32>
    %152 = arith.mulf %143, %124 : vector<8x128xf32>
    %153 = arith.mulf %137, %145 : vector<8x128xf32>
    %154 = arith.addf %152, %153 : vector<8x128xf32>
    %155 = math.tanh %154 : vector<8x128xf32>
    %156 = arith.mulf %151, %155 : vector<8x128xf32>
    %c1_97 = arith.constant 1 : index
    %c0_98 = arith.constant 0 : index
    %c0_99 = arith.constant 0 : index
    %157 = vector.load %arg11[%c1_97, %c0_98, %c0_99] : memref<2x8x128xf32, #tpu.memory_space<vmem>>, vector<1x8x128xf32>
    %158 = vector.shape_cast %157 : vector<1x8x128xf32> to vector<8x128xf32>
    %159 = vector.shape_cast %156 : vector<8x128xf32> to vector<1x8x128xf32>
    tpu.vector_store %arg11[%c1_97, %c0_98, %c0_99], %159 {strides = array<i32>} : memref<2x8x128xf32, #tpu.memory_space<vmem>>, vector<1x8x128xf32>,
    %c1_100 = arith.constant 1 : index
    %c0_101 = arith.constant 0 : index
    %c0_102 = arith.constant 0 : index
    %160 = vector.load %arg12[%c1_100, %c0_101, %c0_102] : memref<2x8x128xf32, #tpu.memory_space<vmem>>, vector<1x8x128xf32>
    %161 = vector.shape_cast %160 : vector<1x8x128xf32> to vector<8x128xf32>
    %162 = vector.shape_cast %154 : vector<8x128xf32> to vector<1x8x128xf32>
    tpu.vector_store %arg12[%c1_100, %c0_101, %c0_102], %162 {strides = array<i32>} : memref<2x8x128xf32, #tpu.memory_space<vmem>>, vector<1x8x128xf32>,
    %c0_103 = arith.constant 0 : index
    %c0_104 = arith.constant 0 : index
    %163 = vector.load %arg13[%c0_103, %c0_104] : memref<8x128xf32, #tpu.memory_space<vmem>>, vector<8x128xf32>
    tpu.vector_store %arg13[%c0_103, %c0_104], %156 {strides = array<i32>} : memref<8x128xf32, #tpu.memory_space<vmem>>, vector<8x128xf32>,
    return
  }
  func.func @transform_0(%arg0: i32) -> i32 {
    %c0_i32 = arith.constant 0 : i32
    %c0_i32_0 = arith.constant 0 : i32
    return %c0_i32 : i32
  }
  func.func @transform_2(%arg0: i32) -> (i32, i32, i32) {
    %c0_i32 = arith.constant 0 : i32
    %c0_i32_0 = arith.constant 0 : i32
    %c0_i32_1 = arith.constant 0 : i32
    %c0_i32_2 = arith.constant 0 : i32
    return %c0_i32, %c0_i32_0, %c0_i32_1 : i32, i32, i32
  }
  func.func @transform_3(%arg0: i32) -> (i32, i32, i32) {
    %c0_i32 = arith.constant 0 : i32
    %c0_i32_0 = arith.constant 0 : i32
    %c0_i32_1 = arith.constant 0 : i32
    %c0_i32_2 = arith.constant 0 : i32
    return %c0_i32, %c0_i32_0, %c0_i32_1 : i32, i32, i32
  }
  func.func @transform_4(%arg0: i32) -> (i32, i32) {
    %c0_i32 = arith.constant 0 : i32
    %c0_i32_0 = arith.constant 0 : i32
    %c0_i32_1 = arith.constant 0 : i32
    return %c0_i32, %c0_i32_0 : i32, i32
  }
  func.func @transform_5(%arg0: i32) -> (i32, i32) {
    %c0_i32 = arith.constant 0 : i32
    %c0_i32_0 = arith.constant 0 : i32
    %c0_i32_1 = arith.constant 0 : i32
    return %c0_i32, %c0_i32_0 : i32, i32
  }
  func.func @transform_6(%arg0: i32) -> (i32, i32) {
    %c0_i32 = arith.constant 0 : i32
    %c0_i32_0 = arith.constant 0 : i32
    %c0_i32_1 = arith.constant 0 : i32
    return %c0_i32, %c0_i32_0 : i32, i32
  }
  func.func @transform_7(%arg0: i32) -> (i32, i32) {
    %c0_i32 = arith.constant 0 : i32
    %c0_i32_0 = arith.constant 0 : i32
    %c0_i32_1 = arith.constant 0 : i32
    return %c0_i32, %c0_i32_0 : i32, i32
  }
  func.func @transform_8(%arg0: i32) -> (i32, i32) {
    %c0_i32 = arith.constant 0 : i32
    %c0_i32_0 = arith.constant 0 : i32
    %c0_i32_1 = arith.constant 0 : i32
    return %c0_i32, %c0_i32_0 : i32, i32
  }
  func.func @transform_9(%arg0: i32) -> (i32, i32) {
    %c0_i32 = arith.constant 0 : i32
    %c0_i32_0 = arith.constant 0 : i32
    %c0_i32_1 = arith.constant 0 : i32
    return %c0_i32, %c0_i32_0 : i32, i32
  }
  func.func @transform_10(%arg0: i32) -> (i32, i32, i32) {
    %c0_i32 = arith.constant 0 : i32
    %c0_i32_0 = arith.constant 0 : i32
    %c0_i32_1 = arith.constant 0 : i32
    %c0_i32_2 = arith.constant 0 : i32
    return %c0_i32, %c0_i32_0, %c0_i32_1 : i32, i32, i32
  }
  func.func @transform_11(%arg0: i32) -> (i32, i32, i32) {
    %c0_i32 = arith.constant 0 : i32
    %c0_i32_0 = arith.constant 0 : i32
    %c0_i32_1 = arith.constant 0 : i32
    %c0_i32_2 = arith.constant 0 : i32
    return %c0_i32, %c0_i32_0, %c0_i32_1 : i32, i32, i32
  }
  func.func @transform_12(%arg0: i32) -> (i32, i32) {
    %c0_i32 = arith.constant 0 : i32
    %c0_i32_0 = arith.constant 0 : i32
    %c0_i32_1 = arith.constant 0 : i32
    return %c0_i32, %c0_i32_0 : i32, i32
  }
}

</mosaic_0001>

<llo_original>
// kernel: decoder_forward.3
$region0: #{decoder_forward.3}
  #allocation0 [shape = 'u32[]', space=smem, size = 0x4, offset = 0x4, fixed_abs, tag = 'smem constant byte address 0x4 - core index']
  #allocation1 [shape = 'u32[144,128]{1,0:T(1,128)}', space=vmem, size = 0x12000, scoped, tag = 'internal scratch']
  %s0 = inlined_call_operand.vmem [shape: f32[8,128], index: 0, kind: input, shape index: {}]
  %s1 = inlined_call_operand.vmem [shape: bf16[128,1024], index: 1, kind: input, shape index: {}]
  %s2 = inlined_call_operand.vmem [shape: f32[1,1024], index: 2, kind: input, shape index: {}]
  %s3 = inlined_call_operand.hbm [shape: f32[8,1024], index: 3, kind: output, shape index: {}]
  %s4 = sld [smem:[#allocation0]]
  $region22: #{decoder_forward.3} parent=0
    _
  %s6 = ssub.s32 1, %s4
  %s7 = scalar_select 0, %s6, %s4
  $region1: #{decoder_forward.3} parent=0
    #allocation2 [shape = 'u8[32768]{0}', space=vmem, size = 0x8000, scoped, tag = 'output window, operand 0, single buffered']
    #allocation3 [shape = 's32[1]{0}', space=sflag, size = 0x4, scoped, tag = 'scoped memory for decoder_forward.3']
    %8 = vsyncpa [#allocation3], 0
    // Predicated region
    $region2: #{decoder_forward.3} parent=1 // pred_check
      _
    $region3: #{decoder_forward.3} parent=1 // pred_check_branch
      %10 = sbr.rel (0) target = $region5
    $region4: #{decoder_forward.3} parent=1 // pred_region
      _
    $region5: #{decoder_forward.3} parent=1 // pred_fallthru
      _
    // Predicated region
    $region6: #{decoder_forward.3} parent=1 // pred_check
      _
    $region7: #{decoder_forward.3} parent=1 // pred_check_branch
      %12 = sbr.rel (0) target = $region9
    $region8: #{decoder_forward.3} parent=1 // pred_region
      _
    $region9: #{decoder_forward.3} parent=1 // pred_fallthru
      _
    // Predicated region
    $region10: #{decoder_forward.3} parent=1 // pred_check
      _
    $region11: #{decoder_forward.3} parent=1 // pred_check_branch
      %14 = sbr.rel (0) target = $region13
    $region12: #{decoder_forward.3} parent=1 // pred_region
      _
    $region13: #{decoder_forward.3} parent=1 // pred_fallthru
      _
    %v16 = vld [vmem:[%s0] sm:$0xff]
    %v17 = vpack.c.bf16 %v16, %v16
    %v18 = vld [vmem:[%s1] sm:$0xff]
    %v19 = vld [vmem:[%s1 + $0x8] sm:$0xff]
    %v20 = vld [vmem:[%s1 + $0x10] sm:$0xff]
    %v21 = vld [vmem:[%s1 + $0x18] sm:$0xff]
    %v22 = vld [vmem:[%s1 + $0x20] sm:$0xff]
    %v23 = vld [vmem:[%s1 + $0x28] sm:$0xff]
    %v24 = vld [vmem:[%s1 + $0x30] sm:$0xff]
    %v25 = vld [vmem:[%s1 + $0x38] sm:$0xff]
    %v26 = vld [vmem:[%s1 + $0x40] sm:$0xff]
    %v27 = vld [vmem:[%s1 + $0x48] sm:$0xff]
    %v28 = vld [vmem:[%s1 + $0x50] sm:$0xff]
    %v29 = vld [vmem:[%s1 + $0x58] sm:$0xff]
    %v30 = vld [vmem:[%s1 + $0x60] sm:$0xff]
    %v31 = vld [vmem:[%s1 + $0x68] sm:$0xff]
    %v32 = vld [vmem:[%s1 + $0x70] sm:$0xff]
    %v33 = vld [vmem:[%s1 + $0x78] sm:$0xff]
    %v34 = vld [vmem:[%s1 + $0x80] sm:$0xff]
    %v35 = vld [vmem:[%s1 + $0x88] sm:$0xff]
    %v36 = vld [vmem:[%s1 + $0x90] sm:$0xff]
    %v37 = vld [vmem:[%s1 + $0x98] sm:$0xff]
    %v38 = vld [vmem:[%s1 + $0xa0] sm:$0xff]
    %v39 = vld [vmem:[%s1 + $0xa8] sm:$0xff]
    %v40 = vld [vmem:[%s1 + $0xb0] sm:$0xff]
    %v41 = vld [vmem:[%s1 + $0xb8] sm:$0xff]
    %v42 = vld [vmem:[%s1 + $0xc0] sm:$0xff]
    %v43 = vld [vmem:[%s1 + $0xc8] sm:$0xff]
    %v44 = vld [vmem:[%s1 + $0xd0] sm:$0xff]
    %v45 = vld [vmem:[%s1 + $0xd8] sm:$0xff]
    %v46 = vld [vmem:[%s1 + $0xe0] sm:$0xff]
    %v47 = vld [vmem:[%s1 + $0xe8] sm:$0xff]
    %v48 = vld [vmem:[%s1 + $0xf0] sm:$0xff]
    %v49 = vld [vmem:[%s1 + $0xf8] sm:$0xff]
    %v50 = vld [vmem:[%s1 + $0x100] sm:$0xff]
    %v51 = vld [vmem:[%s1 + $0x108] sm:$0xff]
    %v52 = vld [vmem:[%s1 + $0x110] sm:$0xff]
    %v53 = vld [vmem:[%s1 + $0x118] sm:$0xff]
    %v54 = vld [vmem:[%s1 + $0x120] sm:$0xff]
    %v55 = vld [vmem:[%s1 + $0x128] sm:$0xff]
    %v56 = vld [vmem:[%s1 + $0x130] sm:$0xff]
    %v57 = vld [vmem:[%s1 + $0x138] sm:$0xff]
    %v58 = vld [vmem:[%s1 + $0x140] sm:$0xff]
    %v59 = vld [vmem:[%s1 + $0x148] sm:$0xff]
    %v60 = vld [vmem:[%s1 + $0x150] sm:$0xff]
    %v61 = vld [vmem:[%s1 + $0x158] sm:$0xff]
    %v62 = vld [vmem:[%s1 + $0x160] sm:$0xff]
    %v63 = vld [vmem:[%s1 + $0x168] sm:$0xff]
    %v64 = vld [vmem:[%s1 + $0x170] sm:$0xff]
    %v65 = vld [vmem:[%s1 + $0x178] sm:$0xff]
    %v66 = vld [vmem:[%s1 + $0x180] sm:$0xff]
    %v67 = vld [vmem:[%s1 + $0x188] sm:$0xff]
    %v68 = vld [vmem:[%s1 + $0x190] sm:$0xff]
    %v69 = vld [vmem:[%s1 + $0x198] sm:$0xff]
    %v70 = vld [vmem:[%s1 + $0x1a0] sm:$0xff]
    %v71 = vld [vmem:[%s1 + $0x1a8] sm:$0xff]
    %v72 = vld [vmem:[%s1 + $0x1b0] sm:$0xff]
    %v73 = vld [vmem:[%s1 + $0x1b8] sm:$0xff]
    %v74 = vld [vmem:[%s1 + $0x1c0] sm:$0xff]
    %v75 = vld [vmem:[%s1 + $0x1c8] sm:$0xff]
    %v76 = vld [vmem:[%s1 + $0x1d0] sm:$0xff]
    %v77 = vld [vmem:[%s1 + $0x1d8] sm:$0xff]
    %v78 = vld [vmem:[%s1 + $0x1e0] sm:$0xff]
    %v79 = vld [vmem:[%s1 + $0x1e8] sm:$0xff]
    %v80 = vld [vmem:[%s1 + $0x1f0] sm:$0xff]
    %v81 = vld [vmem:[%s1 + $0x1f8] sm:$0xff]
    %v82 = vld [vmem:[%s2] sm:$0xff]
    %v84 = vlaneseq
    %v85 = vshrl.u32 %v84, 7
    %v86 = vsub.s32 0, %v85
    %v87 = vrot.slane %v82, %v86
    %v88 = vlaneseq
    %v89 = vshrl.u32 %v88, 7
    %v90 = vsub.s32 1, %v89
    %v91 = vrot.slane %v82, %v90
    %v92 = vlaneseq
    %v93 = vshrl.u32 %v92, 7
    %v94 = vsub.s32 2, %v93
    %v95 = vrot.slane %v82, %v94
    %v96 = vlaneseq
    %v97 = vshrl.u32 %v96, 7
    %v98 = vsub.s32 3, %v97
    %v99 = vrot.slane %v82, %v98
    %v100 = vlaneseq
    %v101 = vshrl.u32 %v100, 7
    %v102 = vsub.s32 4, %v101
    %v103 = vrot.slane %v82, %v102
    %v104 = vlaneseq
    %v105 = vshrl.u32 %v104, 7
    %v106 = vsub.s32 5, %v105
    %v107 = vrot.slane %v82, %v106
    %v108 = vlaneseq
    %v109 = vshrl.u32 %v108, 7
    %v110 = vsub.s32 6, %v109
    %v111 = vrot.slane %v82, %v110
    %v112 = vlaneseq
    %v113 = vshrl.u32 %v112, 7
    %v114 = vsub.s32 7, %v113
    %v115 = vrot.slane %v82, %v114
    %v188 = vunpack.c.l.b16 %v18
    %v189 = vunpack.c.h.b16 %v18
    %v190 = vunpack.c.l.b16 %v19
    %v191 = vunpack.c.h.b16 %v19
    %v192 = vunpack.c.l.b16 %v20
    %v193 = vunpack.c.h.b16 %v20
    %v194 = vunpack.c.l.b16 %v21
    %v195 = vunpack.c.h.b16 %v21
    %v196 = vunpack.c.l.b16 %v22
    %v197 = vunpack.c.h.b16 %v22
    %v198 = vunpack.c.l.b16 %v23
    %v199 = vunpack.c.h.b16 %v23
    %v200 = vunpack.c.l.b16 %v24
    %v201 = vunpack.c.h.b16 %v24
    %v202 = vunpack.c.l.b16 %v25
    %v203 = vunpack.c.h.b16 %v25
    %v204 = vunpack.c.l.b16 %v26
    %v205 = vunpack.c.h.b16 %v26
    %v206 = vunpack.c.l.b16 %v27
    %v207 = vunpack.c.h.b16 %v27
    %v208 = vunpack.c.l.b16 %v28
    %v209 = vunpack.c.h.b16 %v28
    %v210 = vunpack.c.l.b16 %v29
    %v211 = vunpack.c.h.b16 %v29
    %v212 = vunpack.c.l.b16 %v30
    %v213 = vunpack.c.h.b16 %v30
    %v214 = vunpack.c.l.b16 %v31
    %v215 = vunpack.c.h.b16 %v31
    %v216 = vunpack.c.l.b16 %v32
    %v217 = vunpack.c.h.b16 %v32
    %v218 = vunpack.c.l.b16 %v33
    %v219 = vunpack.c.h.b16 %v33
    %v220 = vunpack.c.l.b16 %v34
    %v221 = vunpack.c.h.b16 %v34
    %v222 = vunpack.c.l.b16 %v35
    %v223 = vunpack.c.h.b16 %v35
    %v224 = vunpack.c.l.b16 %v36
    %v225 = vunpack.c.h.b16 %v36
    %v226 = vunpack.c.l.b16 %v37
    %v227 = vunpack.c.h.b16 %v37
    %v228 = vunpack.c.l.b16 %v38
    %v229 = vunpack.c.h.b16 %v38
    %v230 = vunpack.c.l.b16 %v39
    %v231 = vunpack.c.h.b16 %v39
    %v232 = vunpack.c.l.b16 %v40
    %v233 = vunpack.c.h.b16 %v40
    %v234 = vunpack.c.l.b16 %v41
    %v235 = vunpack.c.h.b16 %v41
    %v236 = vunpack.c.l.b16 %v42
    %v237 = vunpack.c.h.b16 %v42
    %v238 = vunpack.c.l.b16 %v43
    %v239 = vunpack.c.h.b16 %v43
    %v240 = vunpack.c.l.b16 %v44
    %v241 = vunpack.c.h.b16 %v44
    %v242 = vunpack.c.l.b16 %v45
    %v243 = vunpack.c.h.b16 %v45
    %v244 = vunpack.c.l.b16 %v46
    %v245 = vunpack.c.h.b16 %v46
    %v246 = vunpack.c.l.b16 %v47
    %v247 = vunpack.c.h.b16 %v47
    %v248 = vunpack.c.l.b16 %v48
    %v249 = vunpack.c.h.b16 %v48
    %v250 = vunpack.c.l.b16 %v49
    %v251 = vunpack.c.h.b16 %v49
    %v252 = vunpack.c.l.b16 %v50
    %v253 = vunpack.c.h.b16 %v50
    %v254 = vunpack.c.l.b16 %v51
    %v255 = vunpack.c.h.b16 %v51
    %v256 = vunpack.c.l.b16 %v52
    %v257 = vunpack.c.h.b16 %v52
    %v258 = vunpack.c.l.b16 %v53
    %v259 = vunpack.c.h.b16 %v53
    %v260 = vunpack.c.l.b16 %v54
    %v261 = vunpack.c.h.b16 %v54
    %v262 = vunpack.c.l.b16 %v55
    %v263 = vunpack.c.h.b16 %v55
    %v264 = vunpack.c.l.b16 %v56
    %v265 = vunpack.c.h.b16 %v56
    %v266 = vunpack.c.l.b16 %v57
    %v267 = vunpack.c.h.b16 %v57
    %v268 = vunpack.c.l.b16 %v58
    %v269 = vunpack.c.h.b16 %v58
    %v270 = vunpack.c.l.b16 %v59
    %v271 = vunpack.c.h.b16 %v59
    %v272 = vunpack.c.l.b16 %v60
    %v273 = vunpack.c.h.b16 %v60
    %v274 = vunpack.c.l.b16 %v61
    %v275 = vunpack.c.h.b16 %v61
    %v276 = vunpack.c.l.b16 %v62
    %v277 = vunpack.c.h.b16 %v62
    %v278 = vunpack.c.l.b16 %v63
    %v279 = vunpack.c.h.b16 %v63
    %v280 = vunpack.c.l.b16 %v64
    %v281 = vunpack.c.h.b16 %v64
    %v282 = vunpack.c.l.b16 %v65
    %v283 = vunpack.c.h.b16 %v65
    %v284 = vunpack.c.l.b16 %v66
    %v285 = vunpack.c.h.b16 %v66
    %v286 = vunpack.c.l.b16 %v67
    %v287 = vunpack.c.h.b16 %v67
    %v288 = vunpack.c.l.b16 %v68
    %v289 = vunpack.c.h.b16 %v68
    %v290 = vunpack.c.l.b16 %v69
    %v291 = vunpack.c.h.b16 %v69
    %v292 = vunpack.c.l.b16 %v70
    %v293 = vunpack.c.h.b16 %v70
    %v294 = vunpack.c.l.b16 %v71
    %v295 = vunpack.c.h.b16 %v71
    %v296 = vunpack.c.l.b16 %v72
    %v297 = vunpack.c.h.b16 %v72
    %v298 = vunpack.c.l.b16 %v73
    %v299 = vunpack.c.h.b16 %v73
    %v300 = vunpack.c.l.b16 %v74
    %v301 = vunpack.c.h.b16 %v74
    %v302 = vunpack.c.l.b16 %v75
    %v303 = vunpack.c.h.b16 %v75
    %v304 = vunpack.c.l.b16 %v76
    %v305 = vunpack.c.h.b16 %v76
    %v306 = vunpack.c.l.b16 %v77
    %v307 = vunpack.c.h.b16 %v77
    %v308 = vunpack.c.l.b16 %v78
    %v309 = vunpack.c.h.b16 %v78
    %v310 = vunpack.c.l.b16 %v79
    %v311 = vunpack.c.h.b16 %v79
    %v312 = vunpack.c.l.b16 %v80
    %v313 = vunpack.c.h.b16 %v80
    %v314 = vunpack.c.l.b16 %v81
    %v315 = vunpack.c.h.b16 %v81
    %v316 = vpack.c.b16 %v196, %v188
    %v317 = vpack.c.b16 %v197, %v189
    %v318 = vpack.c.b16 %v198, %v190
    %v319 = vpack.c.b16 %v199, %v191
    %v320 = vpack.c.b16 %v200, %v192
    %v321 = vpack.c.b16 %v201, %v193
    %v322 = vpack.c.b16 %v202, %v194
    %v323 = vpack.c.b16 %v203, %v195
    %v324 = vpack.c.b16 %v212, %v204
    %v325 = vpack.c.b16 %v213, %v205
    %v326 = vpack.c.b16 %v214, %v206
    %v327 = vpack.c.b16 %v215, %v207
    %v328 = vpack.c.b16 %v216, %v208
    %v329 = vpack.c.b16 %v217, %v209
    %v330 = vpack.c.b16 %v218, %v210
    %v331 = vpack.c.b16 %v219, %v211
    %v332 = vpack.c.b16 %v228, %v220
    %v333 = vpack.c.b16 %v229, %v221
    %v334 = vpack.c.b16 %v230, %v222
    %v335 = vpack.c.b16 %v231, %v223
    %v336 = vpack.c.b16 %v232, %v224
    %v337 = vpack.c.b16 %v233, %v225
    %v338 = vpack.c.b16 %v234, %v226
    %v339 = vpack.c.b16 %v235, %v227
    %v340 = vpack.c.b16 %v244, %v236
    %v341 = vpack.c.b16 %v245, %v237
    %v342 = vpack.c.b16 %v246, %v238
    %v343 = vpack.c.b16 %v247, %v239
    %v344 = vpack.c.b16 %v248, %v240
    %v345 = vpack.c.b16 %v249, %v241
    %v346 = vpack.c.b16 %v250, %v242
    %v347 = vpack.c.b16 %v251, %v243
    %v348 = vpack.c.b16 %v260, %v252
    %v349 = vpack.c.b16 %v261, %v253
    %v350 = vpack.c.b16 %v262, %v254
    %v351 = vpack.c.b16 %v263, %v255
    %v352 = vpack.c.b16 %v264, %v256
    %v353 = vpack.c.b16 %v265, %v257
    %v354 = vpack.c.b16 %v266, %v258
    %v355 = vpack.c.b16 %v267, %v259
    %v356 = vpack.c.b16 %v276, %v268
    %v357 = vpack.c.b16 %v277, %v269
    %v358 = vpack.c.b16 %v278, %v270
    %v359 = vpack.c.b16 %v279, %v271
    %v360 = vpack.c.b16 %v280, %v272
    %v361 = vpack.c.b16 %v281, %v273
    %v362 = vpack.c.b16 %v282, %v274
    %v363 = vpack.c.b16 %v283, %v275
    %v364 = vpack.c.b16 %v292, %v284
    %v365 = vpack.c.b16 %v293, %v285
    %v366 = vpack.c.b16 %v294, %v286
    %v367 = vpack.c.b16 %v295, %v287
    %v368 = vpack.c.b16 %v296, %v288
    %v369 = vpack.c.b16 %v297, %v289
    %v370 = vpack.c.b16 %v298, %v290
    %v371 = vpack.c.b16 %v299, %v291
    %v372 = vpack.c.b16 %v308, %v300
    %v373 = vpack.c.b16 %v309, %v301
    %v374 = vpack.c.b16 %v310, %v302
    %v375 = vpack.c.b16 %v311, %v303
    %v376 = vpack.c.b16 %v312, %v304
    %v377 = vpack.c.b16 %v313, %v305
    %v378 = vpack.c.b16 %v314, %v306
    %v379 = vpack.c.b16 %v315, %v307
    %444 = vmatprep.subr.bf16.mxu0 %v373
    %445 = vmatpush1.bf16.msra.mxu0 %v372
    %446 = vmatprep.subr.bf16.mxu0 %v365
    %447 = vmatpush1.bf16.msra.mxu0 %v364
    %448 = vmatprep.subr.bf16.mxu0 %v357
    %449 = vmatpush1.bf16.msra.mxu0 %v356
    %450 = vmatprep.subr.bf16.mxu0 %v349
    %451 = vmatpush1.bf16.msra.mxu0 %v348
    %452 = vmatprep.subr.bf16.mxu0 %v341
    %453 = vmatpush1.bf16.msra.mxu0 %v340
    %454 = vmatprep.subr.bf16.mxu0 %v333
    %455 = vmatpush1.bf16.msra.mxu0 %v332
    %456 = vmatprep.subr.bf16.mxu0 %v325
    %457 = vmatpush1.bf16.msra.mxu0 %v324
    %458 = vmatprep.subr.bf16.mxu0 %v317
    %459 = vmatpush1.bf16.msra.mxu0 %v316
    %460 = vmatprep.subr.bf16.mxu0 0
    %461 = vmatpush2.bf16.msra.mxu0 0
    %462 = vmatprep.subr.bf16.mxu0 0
    %463 = vmatpush2.bf16.msra.mxu0 0
    %464 = vmatprep.subr.bf16.mxu0 0
    %465 = vmatpush2.bf16.msra.mxu0 0
    %466 = vmatprep.subr.bf16.mxu0 0
    %467 = vmatpush2.bf16.msra.mxu0 0
    %468 = vmatprep.subr.bf16.mxu0 0
    %469 = vmatpush2.bf16.msra.mxu0 0
    %470 = vmatprep.subr.bf16.mxu0 0
    %471 = vmatpush2.bf16.msra.mxu0 0
    %472 = vmatprep.subr.bf16.mxu0 0
    %473 = vmatpush2.bf16.msra.mxu0 0
    %474 = vmatprep.subr.bf16.mxu0 0
    %475 = vmatpush2.bf16.msra.mxu0 0
    %476 = vmatprep.mubr.bf16.mxu0 0
    %477 = vmatmul.mubr.bf16.gmra.mxu0 %v17
    %v478 = vpop.f32.mrf.mxu0
    %v479 = vadd.f32 %v87, %v478
    %v480 = vpop.f32.mrf.mxu0
    %v481 = vadd.f32 %v91, %v480
    %v482 = vpop.f32.mrf.mxu0
    %v483 = vpop.f32.mrf.mxu0
    %484 = vdwg.mxu0
    %485 = vmatprep.subr.bf16.mxu0 %v375
    %486 = vmatpush1.bf16.msra.mxu0 %v374
    %487 = vmatprep.subr.bf16.mxu0 %v367
    %488 = vmatpush1.bf16.msra.mxu0 %v366
    %489 = vmatprep.subr.bf16.mxu0 %v359
    %490 = vmatpush1.bf16.msra.mxu0 %v358
    %491 = vmatprep.subr.bf16.mxu0 %v351
    %492 = vmatpush1.bf16.msra.mxu0 %v350
    %493 = vmatprep.subr.bf16.mxu0 %v343
    %494 = vmatpush1.bf16.msra.mxu0 %v342
    %495 = vmatprep.subr.bf16.mxu0 %v335
    %496 = vmatpush1.bf16.msra.mxu0 %v334
    %497 = vmatprep.subr.bf16.mxu0 %v327
    %498 = vmatpush1.bf16.msra.mxu0 %v326
    %499 = vmatprep.subr.bf16.mxu0 %v319
    %500 = vmatpush1.bf16.msra.mxu0 %v318
    %501 = vmatprep.subr.bf16.mxu0 0
    %502 = vmatpush2.bf16.msra.mxu0 0
    %503 = vmatprep.subr.bf16.mxu0 0
    %504 = vmatpush2.bf16.msra.mxu0 0
    %505 = vmatprep.subr.bf16.mxu0 0
    %506 = vmatpush2.bf16.msra.mxu0 0
    %507 = vmatprep.subr.bf16.mxu0 0
    %508 = vmatpush2.bf16.msra.mxu0 0
    %509 = vmatprep.subr.bf16.mxu0 0
    %510 = vmatpush2.bf16.msra.mxu0 0
    %511 = vmatprep.subr.bf16.mxu0 0
    %512 = vmatpush2.bf16.msra.mxu0 0
    %513 = vmatprep.subr.bf16.mxu0 0
    %514 = vmatpush2.bf16.msra.mxu0 0
    %515 = vmatprep.subr.bf16.mxu0 0
    %516 = vmatpush2.bf16.msra.mxu0 0
    %517 = vmatprep.mubr.bf16.mxu0 0
    %518 = vmatmul.mubr.bf16.gmra.mxu0 %v17
    %v519 = vpop.f32.mrf.mxu0
    %v520 = vadd.f32 %v95, %v519
    %v521 = vpop.f32.mrf.mxu0
    %v522 = vadd.f32 %v99, %v521
    %v523 = vpop.f32.mrf.mxu0
    %v524 = vpop.f32.mrf.mxu0
    %525 = vdwg.mxu0
    %526 = vmatprep.subr.bf16.mxu0 %v377
    %527 = vmatpush1.bf16.msra.mxu0 %v376
    %528 = vmatprep.subr.bf16.mxu0 %v369
    %529 = vmatpush1.bf16.msra.mxu0 %v368
    %530 = vmatprep.subr.bf16.mxu0 %v361
    %531 = vmatpush1.bf16.msra.mxu0 %v360
    %532 = vmatprep.subr.bf16.mxu0 %v353
    %533 = vmatpush1.bf16.msra.mxu0 %v352
    %534 = vmatprep.subr.bf16.mxu0 %v345
    %535 = vmatpush1.bf16.msra.mxu0 %v344
    %536 = vmatprep.subr.bf16.mxu0 %v337
    %537 = vmatpush1.bf16.msra.mxu0 %v336
    %538 = vmatprep.subr.bf16.mxu0 %v329
    %539 = vmatpush1.bf16.msra.mxu0 %v328
    %540 = vmatprep.subr.bf16.mxu0 %v321
    %541 = vmatpush1.bf16.msra.mxu0 %v320
    %542 = vmatprep.subr.bf16.mxu0 0
    %543 = vmatpush2.bf16.msra.mxu0 0
    %544 = vmatprep.subr.bf16.mxu0 0
    %545 = vmatpush2.bf16.msra.mxu0 0
    %546 = vmatprep.subr.bf16.mxu0 0
    %547 = vmatpush2.bf16.msra.mxu0 0
    %548 = vmatprep.subr.bf16.mxu0 0
    %549 = vmatpush2.bf16.msra.mxu0 0
    %550 = vmatprep.subr.bf16.mxu0 0
    %551 = vmatpush2.bf16.msra.mxu0 0
    %552 = vmatprep.subr.bf16.mxu0 0
    %553 = vmatpush2.bf16.msra.mxu0 0
    %554 = vmatprep.subr.bf16.mxu0 0
    %555 = vmatpush2.bf16.msra.mxu0 0
    %556 = vmatprep.subr.bf16.mxu0 0
    %557 = vmatpush2.bf16.msra.mxu0 0
    %558 = vmatprep.mubr.bf16.mxu0 0
    %559 = vmatmul.mubr.bf16.gmra.mxu0 %v17
    %v560 = vpop.f32.mrf.mxu0
    %v561 = vadd.f32 %v103, %v560
    %v562 = vpop.f32.mrf.mxu0
    %v563 = vadd.f32 %v107, %v562
    %v564 = vpop.f32.mrf.mxu0
    %v565 = vpop.f32.mrf.mxu0
    %566 = vdwg.mxu0
    %567 = vmatprep.subr.bf16.mxu0 %v379
    %568 = vmatpush1.bf16.msra.mxu0 %v378
    %569 = vmatprep.subr.bf16.mxu0 %v371
    %570 = vmatpush1.bf16.msra.mxu0 %v370
    %571 = vmatprep.subr.bf16.mxu0 %v363
    %572 = vmatpush1.bf16.msra.mxu0 %v362
    %573 = vmatprep.subr.bf16.mxu0 %v355
    %574 = vmatpush1.bf16.msra.mxu0 %v354
    %575 = vmatprep.subr.bf16.mxu0 %v347
    %576 = vmatpush1.bf16.msra.mxu0 %v346
    %577 = vmatprep.subr.bf16.mxu0 %v339
    %578 = vmatpush1.bf16.msra.mxu0 %v338
    %579 = vmatprep.subr.bf16.mxu0 %v331
    %580 = vmatpush1.bf16.msra.mxu0 %v330
    %581 = vmatprep.subr.bf16.mxu0 %v323
    %582 = vmatpush1.bf16.msra.mxu0 %v322
    %583 = vmatprep.subr.bf16.mxu0 0
    %584 = vmatpush2.bf16.msra.mxu0 0
    %585 = vmatprep.subr.bf16.mxu0 0
    %586 = vmatpush2.bf16.msra.mxu0 0
    %587 = vmatprep.subr.bf16.mxu0 0
    %588 = vmatpush2.bf16.msra.mxu0 0
    %589 = vmatprep.subr.bf16.mxu0 0
    %590 = vmatpush2.bf16.msra.mxu0 0
    %591 = vmatprep.subr.bf16.mxu0 0
    %592 = vmatpush2.bf16.msra.mxu0 0
    %593 = vmatprep.subr.bf16.mxu0 0
    %594 = vmatpush2.bf16.msra.mxu0 0
    %595 = vmatprep.subr.bf16.mxu0 0
    %596 = vmatpush2.bf16.msra.mxu0 0
    %597 = vmatprep.subr.bf16.mxu0 0
    %598 = vmatpush2.bf16.msra.mxu0 0
    %599 = vmatprep.mubr.bf16.mxu0 0
    %600 = vmatmul.mubr.bf16.gmra.mxu0 %v17
    %v601 = vpop.f32.mrf.mxu0
    %v602 = vadd.f32 %v111, %v601
    %v603 = vpop.f32.mrf.mxu0
    %v604 = vadd.f32 %v115, %v603
    %v605 = vpop.f32.mrf.mxu0
    %v606 = vpop.f32.mrf.mxu0
    %607 = vdwg.mxu0
    %608 = vst [vmem:[#allocation2] sm:$0xff] %v479
    %609 = vst [vmem:[#allocation2 + $0x8] sm:$0xff] %v481
    %610 = vst [vmem:[#allocation2 + $0x10] sm:$0xff] %v520
    %611 = vst [vmem:[#allocation2 + $0x18] sm:$0xff] %v522
    %612 = vst [vmem:[#allocation2 + $0x20] sm:$0xff] %v561
    %613 = vst [vmem:[#allocation2 + $0x28] sm:$0xff] %v563
    %614 = vst [vmem:[#allocation2 + $0x30] sm:$0xff] %v602
    %615 = vst [vmem:[#allocation2 + $0x38] sm:$0xff] %v604
    // Predicated region
    $region14: #{decoder_forward.3} parent=1 // pred_check
      _
    $region15: #{decoder_forward.3} parent=1 // pred_check_branch
      %617 = sbr.rel (0) target = $region17
    $region16: #{decoder_forward.3} parent=1 // pred_region
      %s619 = ssub.s32 1024, 1024
      %620 = vsyncadd [#allocation3], %s619
      %s622 = sshll.u32 [#allocation2], 4
      %s623 = int_to_ptr.vmem [resolvable:$true] %s622
      %625 = dma.vmem_to_hbm [thread:$0]  %s623, 1024, %s3, [#allocation3]
    $region17: #{decoder_forward.3} parent=1 // pred_fallthru
      _
    // Predicated region
    $region18: #{decoder_forward.3} parent=1 // pred_check
      _
    $region19: #{decoder_forward.3} parent=1 // pred_check_branch
      %627 = sbr.rel (0) target = $region21
    $region20: #{decoder_forward.3} parent=1 // pred_region
      %628 = dma.done [#allocation3], 1024
    $region21: #{decoder_forward.3} parent=1 // pred_fallthru
      _
    %629 = vsyncpa [#allocation3], 1

// kernel: decoder_forward.2
$region0: #{decoder_forward.2}
  #allocation0 [shape = 'u32[]', space=smem, size = 0x4, offset = 0x4, fixed_abs, tag = 'smem constant byte address 0x4 - core index']
  #allocation1 [shape = 'u32[144,128]{1,0:T(1,128)}', space=vmem, size = 0x12000, scoped, tag = 'internal scratch']
  #allocation2 [shape = 'f32[8,128]{1,0:T(8,128)}', space=vmem, size = 0x1000, scoped, tag = 'scratch operand']
  #allocation3 [shape = 's32[8]{0}', space=sflag, size = 0x20, scoped, tag = 'scratch operand']
  #allocation13 [shape = 's32[]', space=sflag, size = 0x4, offset = 0, fixed_abs, tag = 'sflag constant byte address 0x0 - dummy sync flag']
  #allocation14 [shape = 's32[]', space=sflag, size = 0x4, offset = 0, fixed_abs, tag = 'sflag constant byte address 0x0 - dummy sync flag']
  #allocation15 [shape = 'u32[]', space=smem, size = 0x4, offset = 0x44, fixed_abs, tag = 'smem constant byte address 0x44 - assertion arg 0']
  #allocation16 [shape = 'u32[]', space=smem, size = 0x4, offset = 0x48, fixed_abs, tag = 'smem constant byte address 0x48 - assertion arg 1']
  #allocation17 [shape = 's32[]', space=sflag, size = 0x4, offset = 0, fixed_abs, tag = 'sflag constant byte address 0x0 - dummy sync flag']
  #allocation18 [shape = 's32[]', space=sflag, size = 0x4, offset = 0, fixed_abs, tag = 'sflag constant byte address 0x0 - dummy sync flag']
  #allocation19 [shape = 's32[]', space=sflag, size = 0x4, offset = 0, fixed_abs, tag = 'sflag constant byte address 0x0 - dummy sync flag']
  #allocation20 [shape = 's32[]', space=sflag, size = 0x4, offset = 0, fixed_abs, tag = 'sflag constant byte address 0x0 - dummy sync flag']
  #allocation21 [shape = 's32[]', space=sflag, size = 0x4, offset = 0, fixed_abs, tag = 'sflag constant byte address 0x0 - dummy sync flag']
  #allocation22 [shape = 's32[]', space=sflag, size = 0x4, offset = 0, fixed_abs, tag = 'sflag constant byte address 0x0 - dummy sync flag']
  #allocation23 [shape = 's32[]', space=sflag, size = 0x4, offset = 0, fixed_abs, tag = 'sflag constant byte address 0x0 - dummy sync flag']
  #allocation24 [shape = 's32[]', space=sflag, size = 0x4, offset = 0, fixed_abs, tag = 'sflag constant byte address 0x0 - dummy sync flag']
  #allocation25 [shape = 's32[]', space=sflag, size = 0x4, offset = 0, fixed_abs, tag = 'sflag constant byte address 0x0 - dummy sync flag']
  #allocation26 [shape = 's32[]', space=sflag, size = 0x4, offset = 0, fixed_abs, tag = 'sflag constant byte address 0x0 - dummy sync flag']
  #allocation27 [shape = 's32[]', space=sflag, size = 0x4, offset = 0, fixed_abs, tag = 'sflag constant byte address 0x0 - dummy sync flag']
  #allocation28 [shape = 's32[]', space=sflag, size = 0x4, offset = 0, fixed_abs, tag = 'sflag constant byte address 0x0 - dummy sync flag']
  #allocation29 [shape = 's32[]', space=sflag, size = 0x4, offset = 0, fixed_abs, tag = 'sflag constant byte address 0x0 - dummy sync flag']
  #allocation30 [shape = 's32[]', space=sflag, size = 0x4, offset = 0, fixed_abs, tag = 'sflag constant byte address 0x0 - dummy sync flag']
  %s0 = inlined_call_operand.vmem [shape: s32[8], index: 0, kind: input, shape index: {}]
  %s1 = inlined_call_operand.hbm [shape: f32[1024,128], index: 1, kind: input, shape index: {}]
  %s2 = inlined_call_operand.vmem [shape: f32[2,8,128], index: 2, kind: input, shape index: {}, may-alias: {2,10}]
  %s3 = inlined_call_operand.vmem [shape: f32[2,8,128], index: 3, kind: input, shape index: {}, may-alias: {3,11}]
  %s4 = inlined_call_operand.hbm [shape: bf16[128,512], index: 4, kind: input, shape index: {}]
  %s5 = inlined_call_operand.hbm [shape: bf16[128,512], index: 5, kind: input, shape index: {}]
  %s6 = inlined_call_operand.vmem [shape: f32[1,512], index: 6, kind: input, shape index: {}]
  %s7 = inlined_call_operand.hbm [shape: bf16[128,512], index: 7, kind: input, shape index: {}]
  %s8 = inlined_call_operand.hbm [shape: bf16[128,512], index: 8, kind: input, shape index: {}]
  %s9 = inlined_call_operand.vmem [shape: f32[1,512], index: 9, kind: input, shape index: {}]
  %s10 = inlined_call_operand.vmem [shape: f32[2,8,128], index: 10, kind: output, shape index: {0}, may-alias: {2,10}]
  %s11 = inlined_call_operand.vmem [shape: f32[2,8,128], index: 11, kind: output, shape index: {1}, may-alias: {3,11}]
  %s12 = inlined_call_operand.vmem [shape: f32[8,128], index: 12, kind: output, shape index: {2}]
  %13 = xla_tuple %s10, %s11, %s12
  %s14 = sld [smem:[#allocation0]]
  $region114: #{decoder_forward.2} parent=0
    _
  %s16 = ssub.s32 1, %s14
  %s17 = scalar_select 0, %s16, %s14
  $region1: #{decoder_forward.2} parent=0
    #allocation4 [shape = 'u8[512]{0}', space=smem, size = 0x200, scoped, tag = 'input window, operand 0, single buffered']
    #allocation5 [shape = 's32[1]{0}', space=sflag, size = 0x4, scoped, tag = 'scoped memory for decoder_forward.2']
    #allocation6 [shape = 's32[1]{0}', space=sflag, size = 0x4, scoped, tag = 'scoped memory for decoder_forward.2']
    #allocation7 [shape = 'u8[131072]{0}', space=vmem, size = 0x20000, scoped, tag = 'input window, operand 4, single buffered']
    #allocation8 [shape = 'u8[131072]{0}', space=vmem, size = 0x20000, scoped, tag = 'input window, operand 5, single buffered']
    #allocation9 [shape = 's32[1]{0}', space=sflag, size = 0x4, scoped, tag = 'scoped memory for decoder_forward.2']
    #allocation10 [shape = 'u8[131072]{0}', space=vmem, size = 0x20000, scoped, tag = 'input window, operand 7, single buffered']
    #allocation11 [shape = 'u8[131072]{0}', space=vmem, size = 0x20000, scoped, tag = 'input window, operand 8, single buffered']
    #allocation12 [shape = 's32[1]{0}', space=sflag, size = 0x4, scoped, tag = 'scoped memory for decoder_forward.2']
    %18 = vsyncpa [#allocation6], 0
    %19 = vsyncpa [#allocation5], 0
    %20 = vsyncpa [#allocation9], 0
    %21 = vsyncpa [#allocation12], 0
    // Predicated region
    $region2: #{decoder_forward.2} parent=1 // pred_check
      _
    $region3: #{decoder_forward.2} parent=1 // pred_check_branch
      %23 = sbr.rel (0) target = $region5
    $region4: #{decoder_forward.2} parent=1 // pred_region
      %s25 = ssub.s32 16, 16
      %26 = vsyncadd [#allocation6], %s25
      %s28 = sshll.u32 %s0, 4
      %s29 = int_to_ptr.vmem [resolvable:$true] %s28
      %31 = dma.vmem_to_smem %s29, 16, [#allocation4], [#allocation6]
    $region5: #{decoder_forward.2} parent=1 // pred_fallthru
      _
    // Predicated region
    $region6: #{decoder_forward.2} parent=1 // pred_check
      _
    $region7: #{decoder_forward.2} parent=1 // pred_check_branch
      %33 = sbr.rel (0) target = $region9
    $region8: #{decoder_forward.2} parent=1 // pred_region
      _
    $region9: #{decoder_forward.2} parent=1 // pred_fallthru
      _
    // Predicated region
    $region10: #{decoder_forward.2} parent=1 // pred_check
      _
    $region11: #{decoder_forward.2} parent=1 // pred_check_branch
      %35 = sbr.rel (0) target = $region13
    $region12: #{decoder_forward.2} parent=1 // pred_region
      _
    $region13: #{decoder_forward.2} parent=1 // pred_fallthru
      _
    // Predicated region
    $region14: #{decoder_forward.2} parent=1 // pred_check
      _
    $region15: #{decoder_forward.2} parent=1 // pred_check_branch
      %37 = sbr.rel (0) target = $region17
    $region16: #{decoder_forward.2} parent=1 // pred_region
      %s39 = ssub.s32 4096, 4096
      %40 = vsyncadd [#allocation5], %s39
      %s41 = sshll.u32 [#allocation7], 4
      %s42 = int_to_ptr.vmem [resolvable:$true] %s41
      %47 = dma.hbm_to_vmem [thread:$0]  %s4, 4096, %s42, [#allocation5], 256, 256, 16
    $region17: #{decoder_forward.2} parent=1 // pred_fallthru
      _
    // Predicated region
    $region18: #{decoder_forward.2} parent=1 // pred_check
      _
    $region19: #{decoder_forward.2} parent=1 // pred_check_branch
      %49 = sbr.rel (0) target = $region21
    $region20: #{decoder_forward.2} parent=1 // pred_region
      %s51 = ssub.s32 4096, 4096
      %52 = vsyncadd [#allocation9], %s51
      %s53 = sshll.u32 [#allocation8], 4
      %s54 = int_to_ptr.vmem [resolvable:$true] %s53
      %59 = dma.hbm_to_vmem [thread:$0]  %s5, 4096, %s54, [#allocation9], 256, 256, 16
    $region21: #{decoder_forward.2} parent=1 // pred_fallthru
      _
    // Predicated region
    $region22: #{decoder_forward.2} parent=1 // pred_check
      _
    $region23: #{decoder_forward.2} parent=1 // pred_check_branch
      %61 = sbr.rel (0) target = $region25
    $region24: #{decoder_forward.2} parent=1 // pred_region
      _
    $region25: #{decoder_forward.2} parent=1 // pred_fallthru
      _
    // Predicated region
    $region26: #{decoder_forward.2} parent=1 // pred_check
      _
    $region27: #{decoder_forward.2} parent=1 // pred_check_branch
      %63 = sbr.rel (0) target = $region29
    $region28: #{decoder_forward.2} parent=1 // pred_region
      %s65 = ssub.s32 4096, 4096
      %66 = vsyncadd [#allocation9], %s65
      %s67 = sshll.u32 [#allocation10], 4
      %s68 = int_to_ptr.vmem [resolvable:$true] %s67
      %73 = dma.hbm_to_vmem [thread:$0]  %s7, 4096, %s68, [#allocation9], 256, 256, 16
    $region29: #{decoder_forward.2} parent=1 // pred_fallthru
      _
    // Predicated region
    $region30: #{decoder_forward.2} parent=1 // pred_check
      _
    $region31: #{decoder_forward.2} parent=1 // pred_check_branch
      %75 = sbr.rel (0) target = $region33
    $region32: #{decoder_forward.2} parent=1 // pred_region
      %s77 = ssub.s32 4096, 4096
      %78 = vsyncadd [#allocation12], %s77
      %s79 = sshll.u32 [#allocation11], 4
      %s80 = int_to_ptr.vmem [resolvable:$true] %s79
      %85 = dma.hbm_to_vmem [thread:$0]  %s8, 4096, %s80, [#allocation12], 256, 256, 16
    $region33: #{decoder_forward.2} parent=1 // pred_fallthru
      _
    // Predicated region
    $region34: #{decoder_forward.2} parent=1 // pred_check
      _
    $region35: #{decoder_forward.2} parent=1 // pred_check_branch
      %87 = sbr.rel (0) target = $region37
    $region36: #{decoder_forward.2} parent=1 // pred_region
      _
    $region37: #{decoder_forward.2} parent=1 // pred_fallthru
      _
    // Predicated region
    $region38: #{decoder_forward.2} parent=1 // pred_check
      _
    $region39: #{decoder_forward.2} parent=1 // pred_check_branch
      %89 = sbr.rel (0) target = $region41
    $region40: #{decoder_forward.2} parent=1 // pred_region
      %90 = dma.done [#allocation6], 16
    $region41: #{decoder_forward.2} parent=1 // pred_fallthru
      _
    // Predicated region
    $region42: #{decoder_forward.2} parent=1 // pred_check
      _
    $region43: #{decoder_forward.2} parent=1 // pred_check_branch
      %92 = sbr.rel (0) target = $region45
    $region44: #{decoder_forward.2} parent=1 // pred_region
      %93 = dma.done [#allocation5], 4096
    $region45: #{decoder_forward.2} parent=1 // pred_fallthru
      _
    // Predicated region
    $region46: #{decoder_forward.2} parent=1 // pred_check
      _
    $region47: #{decoder_forward.2} parent=1 // pred_check_branch
      %95 = sbr.rel (0) target = $region49
    $region48: #{decoder_forward.2} parent=1 // pred_region
      %96 = dma.done [#allocation9], 4096
    $region49: #{decoder_forward.2} parent=1 // pred_fallthru
      _
    // Predicated region
    $region50: #{decoder_forward.2} parent=1 // pred_check
      _
    $region51: #{decoder_forward.2} parent=1 // pred_check_branch
      %98 = sbr.rel (0) target = $region53
    $region52: #{decoder_forward.2} parent=1 // pred_region
      %99 = dma.done [#allocation9], 4096
    $region53: #{decoder_forward.2} parent=1 // pred_fallthru
      _
    // Predicated region
    $region54: #{decoder_forward.2} parent=1 // pred_check
      _
    $region55: #{decoder_forward.2} parent=1 // pred_check_branch
      %101 = sbr.rel (0) target = $region57
    $region56: #{decoder_forward.2} parent=1 // pred_region
      %102 = dma.done [#allocation12], 4096
    $region57: #{decoder_forward.2} parent=1 // pred_fallthru
      _
    %103 = sfence
    %s105 = sld [smem:[#allocation4]]
    %s106 = smul.addr %s105, 16
    %s107 = scalar_lea.hbm %s1, %s106
    // Predicated region
    $region58: #{decoder_forward.2} parent=1 // pred_check
      _
    $region59: #{decoder_forward.2} parent=1 // pred_check_branch
      %109 = sbr.rel target = $region61
    $region60: #{decoder_forward.2} parent=1 // pred_region
      %110 = sst [smem:[#allocation15]] [#allocation14]
      %111 = sst [smem:[#allocation16]] [#allocation13]
    $region61: #{decoder_forward.2} parent=1 // pred_fallthru
      _
    %113 = shalt.err (0)
    %s115 = sshll.u32 [#allocation2], 4
    %s116 = int_to_ptr.vmem [resolvable:$true] %s115
    %118 = dma.hbm_to_vmem [thread:$0]  %s107, 16, %s116, [#allocation3]
    %s119 = sld [smem:[#allocation4 + $0x1]]
    %s120 = smul.addr %s119, 16
    %s121 = scalar_lea.hbm %s1, %s120
    %s122 = scalar_lea.vmem [#allocation2], 1
    %s123 = scalar_lea.sflag [#allocation3], 1
    // Predicated region
    $region62: #{decoder_forward.2} parent=1 // pred_check
      _
    $region63: #{decoder_forward.2} parent=1 // pred_check_branch
      %125 = sbr.rel target = $region65
    $region64: #{decoder_forward.2} parent=1 // pred_region
      %126 = sst [smem:[#allocation15]] [#allocation18]
      %127 = sst [smem:[#allocation16]] [#allocation17]
    $region65: #{decoder_forward.2} parent=1 // pred_fallthru
      _
    %129 = shalt.err (0)
    %s131 = sshll.u32 %s122, 4
    %s132 = int_to_ptr.vmem [resolvable:$true] %s131
    %134 = dma.hbm_to_vmem [thread:$0]  %s121, 16, %s132, %s123
    %s135 = sld [smem:[#allocation4 + $0x2]]
    %s136 = smul.addr %s135, 16
    %s137 = scalar_lea.hbm %s1, %s136
    %s138 = scalar_lea.vmem [#allocation2], 2
    %s139 = scalar_lea.sflag [#allocation3], 2
    // Predicated region
    $region66: #{decoder_forward.2} parent=1 // pred_check
      _
    $region67: #{decoder_forward.2} parent=1 // pred_check_branch
      %141 = sbr.rel target = $region69
    $region68: #{decoder_forward.2} parent=1 // pred_region
      %142 = sst [smem:[#allocation15]] [#allocation20]
      %143 = sst [smem:[#allocation16]] [#allocation19]
    $region69: #{decoder_forward.2} parent=1 // pred_fallthru
      _
    %145 = shalt.err (0)
    %s147 = sshll.u32 %s138, 4
    %s148 = int_to_ptr.vmem [resolvable:$true] %s147
    %150 = dma.hbm_to_vmem [thread:$0]  %s137, 16, %s148, %s139
    %s151 = sld [smem:[#allocation4 + $0x3]]
    %s152 = smul.addr %s151, 16
    %s153 = scalar_lea.hbm %s1, %s152
    %s154 = scalar_lea.vmem [#allocation2], 3
    %s155 = scalar_lea.sflag [#allocation3], 3
    // Predicated region
    $region70: #{decoder_forward.2} parent=1 // pred_check
      _
    $region71: #{decoder_forward.2} parent=1 // pred_check_branch
      %157 = sbr.rel target = $region73
    $region72: #{decoder_forward.2} parent=1 // pred_region
      %158 = sst [smem:[#allocation15]] [#allocation22]
      %159 = sst [smem:[#allocation16]] [#allocation21]
    $region73: #{decoder_forward.2} parent=1 // pred_fallthru
      _
    %161 = shalt.err (0)
    %s163 = sshll.u32 %s154, 4
    %s164 = int_to_ptr.vmem [resolvable:$true] %s163
    %166 = dma.hbm_to_vmem [thread:$0]  %s153, 16, %s164, %s155
    %s167 = sld [smem:[#allocation4 + $0x4]]
    %s168 = smul.addr %s167, 16
    %s169 = scalar_lea.hbm %s1, %s168
    %s170 = scalar_lea.vmem [#allocation2], 4
    %s171 = scalar_lea.sflag [#allocation3], 4
    // Predicated region
    $region74: #{decoder_forward.2} parent=1 // pred_check
      _
    $region75: #{decoder_forward.2} parent=1 // pred_check_branch
      %173 = sbr.rel target = $region77
    $region76: #{decoder_forward.2} parent=1 // pred_region
      %174 = sst [smem:[#allocation15]] [#allocation24]
      %175 = sst [smem:[#allocation16]] [#allocation23]
    $region77: #{decoder_forward.2} parent=1 // pred_fallthru
      _
    %177 = shalt.err (0)
    %s179 = sshll.u32 %s170, 4
    %s180 = int_to_ptr.vmem [resolvable:$true] %s179
    %182 = dma.hbm_to_vmem [thread:$0]  %s169, 16, %s180, %s171
    %s183 = sld [smem:[#allocation4 + $0x5]]
    %s184 = smul.addr %s183, 16
    %s185 = scalar_lea.hbm %s1, %s184
    %s186 = scalar_lea.vmem [#allocation2], 5
    %s187 = scalar_lea.sflag [#allocation3], 5
    // Predicated region
    $region78: #{decoder_forward.2} parent=1 // pred_check
      _
    $region79: #{decoder_forward.2} parent=1 // pred_check_branch
      %189 = sbr.rel target = $region81
    $region80: #{decoder_forward.2} parent=1 // pred_region
      %190 = sst [smem:[#allocation15]] [#allocation26]
      %191 = sst [smem:[#allocation16]] [#allocation25]
    $region81: #{decoder_forward.2} parent=1 // pred_fallthru
      _
    %193 = shalt.err (0)
    %s195 = sshll.u32 %s186, 4
    %s196 = int_to_ptr.vmem [resolvable:$true] %s195
    %198 = dma.hbm_to_vmem [thread:$0]  %s185, 16, %s196, %s187
    %s199 = sld [smem:[#allocation4 + $0x6]]
    %s200 = smul.addr %s199, 16
    %s201 = scalar_lea.hbm %s1, %s200
    %s202 = scalar_lea.vmem [#allocation2], 6
    %s203 = scalar_lea.sflag [#allocation3], 6
    // Predicated region
    $region82: #{decoder_forward.2} parent=1 // pred_check
      _
    $region83: #{decoder_forward.2} parent=1 // pred_check_branch
      %205 = sbr.rel target = $region85
    $region84: #{decoder_forward.2} parent=1 // pred_region
      %206 = sst [smem:[#allocation15]] [#allocation28]
      %207 = sst [smem:[#allocation16]] [#allocation27]
    $region85: #{decoder_forward.2} parent=1 // pred_fallthru
      _
    %209 = shalt.err (0)
    %s211 = sshll.u32 %s202, 4
    %s212 = int_to_ptr.vmem [resolvable:$true] %s211
    %214 = dma.hbm_to_vmem [thread:$0]  %s201, 16, %s212, %s203
    %s215 = sld [smem:[#allocation4 + $0x7]]
    %s216 = smul.addr %s215, 16
    %s217 = scalar_lea.hbm %s1, %s216
    %s218 = scalar_lea.vmem [#allocation2], 7
    %s219 = scalar_lea.sflag [#allocation3], 7
    // Predicated region
    $region86: #{decoder_forward.2} parent=1 // pred_check
      _
    $region87: #{decoder_forward.2} parent=1 // pred_check_branch
      %221 = sbr.rel target = $region89
    $region88: #{decoder_forward.2} parent=1 // pred_region
      %222 = sst [smem:[#allocation15]] [#allocation30]
      %223 = sst [smem:[#allocation16]] [#allocation29]
    $region89: #{decoder_forward.2} parent=1 // pred_fallthru
      _
    %225 = shalt.err (0)
    %s227 = sshll.u32 %s218, 4
    %s228 = int_to_ptr.vmem [resolvable:$true] %s227
    %230 = dma.hbm_to_vmem [thread:$0]  %s217, 16, %s228, %s219
    %s231 = smul.u32 1, 1
    %s232 = sshll.u32 %s231, 4
    %233 = dma.done [#allocation3], %s232
    %s234 = sshll.u32 %s231, 4
    %235 = dma.done %s123, %s234
    %s236 = sshll.u32 %s231, 4
    %237 = dma.done %s139, %s236
    %s238 = sshll.u32 %s231, 4
    %239 = dma.done %s155, %s238
    %s240 = sshll.u32 %s231, 4
    %241 = dma.done %s171, %s240
    %s242 = sshll.u32 %s231, 4
    %243 = dma.done %s187, %s242
    %s244 = sshll.u32 %s231, 4
    %245 = dma.done %s203, %s244
    %s246 = sshll.u32 %s231, 4
    %247 = dma.done %s219, %s246
    %v248 = vld [vmem:[#allocation2] sm:$0xff]
    %v249 = vld [vmem:[#allocation7] sm:$0xff]
    %v250 = vld [vmem:[#allocation7 + $0x8] sm:$0xff]
    %v251 = vld [vmem:[#allocation7 + $0x10] sm:$0xff]
    %v252 = vld [vmem:[#allocation7 + $0x18] sm:$0xff]
    %v253 = vld [vmem:[#allocation7 + $0x20] sm:$0xff]
    %v254 = vld [vmem:[#allocation7 + $0x28] sm:$0xff]
    %v255 = vld [vmem:[#allocation7 + $0x30] sm:$0xff]
    %v256 = vld [vmem:[#allocation7 + $0x38] sm:$0xff]
    %v257 = vld [vmem:[#allocation7 + $0x40] sm:$0xff]
    %v258 = vld [vmem:[#allocation7 + $0x48] sm:$0xff]
    %v259 = vld [vmem:[#allocation7 + $0x50] sm:$0xff]
    %v260 = vld [vmem:[#allocation7 + $0x58] sm:$0xff]
    %v261 = vld [vmem:[#allocation7 + $0x60] sm:$0xff]
    %v262 = vld [vmem:[#allocation7 + $0x68] sm:$0xff]
    %v263 = vld [vmem:[#allocation7 + $0x70] sm:$0xff]
    %v264 = vld [vmem:[#allocation7 + $0x78] sm:$0xff]
    %v265 = vld [vmem:[#allocation7 + $0x80] sm:$0xff]
    %v266 = vld [vmem:[#allocation7 + $0x88] sm:$0xff]
    %v267 = vld [vmem:[#allocation7 + $0x90] sm:$0xff]
    %v268 = vld [vmem:[#allocation7 + $0x98] sm:$0xff]
    %v269 = vld [vmem:[#allocation7 + $0xa0] sm:$0xff]
    %v270 = vld [vmem:[#allocation7 + $0xa8] sm:$0xff]
    %v271 = vld [vmem:[#allocation7 + $0xb0] sm:$0xff]
    %v272 = vld [vmem:[#allocation7 + $0xb8] sm:$0xff]
    %v273 = vld [vmem:[#allocation7 + $0xc0] sm:$0xff]
    %v274 = vld [vmem:[#allocation7 + $0xc8] sm:$0xff]
    %v275 = vld [vmem:[#allocation7 + $0xd0] sm:$0xff]
    %v276 = vld [vmem:[#allocation7 + $0xd8] sm:$0xff]
    %v277 = vld [vmem:[#allocation7 + $0xe0] sm:$0xff]
    %v278 = vld [vmem:[#allocation7 + $0xe8] sm:$0xff]
    %v279 = vld [vmem:[#allocation7 + $0xf0] sm:$0xff]
    %v280 = vld [vmem:[#allocation7 + $0xf8] sm:$0xff]
    %v281 = vld [vmem:[#allocation8] sm:$0xff]
    %v282 = vld [vmem:[#allocation8 + $0x8] sm:$0xff]
    %v283 = vld [vmem:[#allocation8 + $0x10] sm:$0xff]
    %v284 = vld [vmem:[#allocation8 + $0x18] sm:$0xff]
    %v285 = vld [vmem:[#allocation8 + $0x20] sm:$0xff]
    %v286 = vld [vmem:[#allocation8 + $0x28] sm:$0xff]
    %v287 = vld [vmem:[#allocation8 + $0x30] sm:$0xff]
    %v288 = vld [vmem:[#allocation8 + $0x38] sm:$0xff]
    %v289 = vld [vmem:[#allocation8 + $0x40] sm:$0xff]
    %v290 = vld [vmem:[#allocation8 + $0x48] sm:$0xff]
    %v291 = vld [vmem:[#allocation8 + $0x50] sm:$0xff]
    %v292 = vld [vmem:[#allocation8 + $0x58] sm:$0xff]
    %v293 = vld [vmem:[#allocation8 + $0x60] sm:$0xff]
    %v294 = vld [vmem:[#allocation8 + $0x68] sm:$0xff]
    %v295 = vld [vmem:[#allocation8 + $0x70] sm:$0xff]
    %v296 = vld [vmem:[#allocation8 + $0x78] sm:$0xff]
    %v297 = vld [vmem:[#allocation8 + $0x80] sm:$0xff]
    %v298 = vld [vmem:[#allocation8 + $0x88] sm:$0xff]
    %v299 = vld [vmem:[#allocation8 + $0x90] sm:$0xff]
    %v300 = vld [vmem:[#allocation8 + $0x98] sm:$0xff]
    %v301 = vld [vmem:[#allocation8 + $0xa0] sm:$0xff]
    %v302 = vld [vmem:[#allocation8 + $0xa8] sm:$0xff]
    %v303 = vld [vmem:[#allocation8 + $0xb0] sm:$0xff]
    %v304 = vld [vmem:[#allocation8 + $0xb8] sm:$0xff]
    %v305 = vld [vmem:[#allocation8 + $0xc0] sm:$0xff]
    %v306 = vld [vmem:[#allocation8 + $0xc8] sm:$0xff]
    %v307 = vld [vmem:[#allocation8 + $0xd0] sm:$0xff]
    %v308 = vld [vmem:[#allocation8 + $0xd8] sm:$0xff]
    %v309 = vld [vmem:[#allocation8 + $0xe0] sm:$0xff]
    %v310 = vld [vmem:[#allocation8 + $0xe8] sm:$0xff]
    %v311 = vld [vmem:[#allocation8 + $0xf0] sm:$0xff]
    %v312 = vld [vmem:[#allocation8 + $0xf8] sm:$0xff]
    %v313 = vld [vmem:[%s6] sm:$0xf]
    %v314 = vld [vmem:[%s2] sm:$0xff]
    %v315 = vld [vmem:[%s3] sm:$0xff]
    %v316 = vpack.c.bf16 %v248, %v248
    %v317 = vpack.c.bf16 %v314, %v314
    %v350 = vunpack.c.l.b16 %v281
    %v351 = vunpack.c.h.b16 %v281
    %v352 = vunpack.c.l.b16 %v282
    %v353 = vunpack.c.h.b16 %v282
    %v354 = vunpack.c.l.b16 %v283
    %v355 = vunpack.c.h.b16 %v283
    %v356 = vunpack.c.l.b16 %v284
    %v357 = vunpack.c.h.b16 %v284
    %v358 = vunpack.c.l.b16 %v285
    %v359 = vunpack.c.h.b16 %v285
    %v360 = vunpack.c.l.b16 %v286
    %v361 = vunpack.c.h.b16 %v286
    %v362 = vunpack.c.l.b16 %v287
    %v363 = vunpack.c.h.b16 %v287
    %v364 = vunpack.c.l.b16 %v288
    %v365 = vunpack.c.h.b16 %v288
    %v366 = vunpack.c.l.b16 %v289
    %v367 = vunpack.c.h.b16 %v289
    %v368 = vunpack.c.l.b16 %v290
    %v369 = vunpack.c.h.b16 %v290
    %v370 = vunpack.c.l.b16 %v291
    %v371 = vunpack.c.h.b16 %v291
    %v372 = vunpack.c.l.b16 %v292
    %v373 = vunpack.c.h.b16 %v292
    %v374 = vunpack.c.l.b16 %v293
    %v375 = vunpack.c.h.b16 %v293
    %v376 = vunpack.c.l.b16 %v294
    %v377 = vunpack.c.h.b16 %v294
    %v378 = vunpack.c.l.b16 %v295
    %v379 = vunpack.c.h.b16 %v295
    %v380 = vunpack.c.l.b16 %v296
    %v381 = vunpack.c.h.b16 %v296
    %v382 = vunpack.c.l.b16 %v297
    %v383 = vunpack.c.h.b16 %v297
    %v384 = vunpack.c.l.b16 %v298
    %v385 = vunpack.c.h.b16 %v298
    %v386 = vunpack.c.l.b16 %v299
    %v387 = vunpack.c.h.b16 %v299
    %v388 = vunpack.c.l.b16 %v300
    %v389 = vunpack.c.h.b16 %v300
    %v390 = vunpack.c.l.b16 %v301
    %v391 = vunpack.c.h.b16 %v301
    %v392 = vunpack.c.l.b16 %v302
    %v393 = vunpack.c.h.b16 %v302
    %v394 = vunpack.c.l.b16 %v303
    %v395 = vunpack.c.h.b16 %v303
    %v396 = vunpack.c.l.b16 %v304
    %v397 = vunpack.c.h.b16 %v304
    %v398 = vunpack.c.l.b16 %v305
    %v399 = vunpack.c.h.b16 %v305
    %v400 = vunpack.c.l.b16 %v306
    %v401 = vunpack.c.h.b16 %v306
    %v402 = vunpack.c.l.b16 %v307
    %v403 = vunpack.c.h.b16 %v307
    %v404 = vunpack.c.l.b16 %v308
    %v405 = vunpack.c.h.b16 %v308
    %v406 = vunpack.c.l.b16 %v309
    %v407 = vunpack.c.h.b16 %v309
    %v408 = vunpack.c.l.b16 %v310
    %v409 = vunpack.c.h.b16 %v310
    %v410 = vunpack.c.l.b16 %v311
    %v411 = vunpack.c.h.b16 %v311
    %v412 = vunpack.c.l.b16 %v312
    %v413 = vunpack.c.h.b16 %v312
    %v414 = vpack.c.b16 %v354, %v350
    %v415 = vpack.c.b16 %v355, %v351
    %v416 = vpack.c.b16 %v356, %v352
    %v417 = vpack.c.b16 %v357, %v353
    %v418 = vpack.c.b16 %v362, %v358
    %v419 = vpack.c.b16 %v363, %v359
    %v420 = vpack.c.b16 %v364, %v360
    %v421 = vpack.c.b16 %v365, %v361
    %v422 = vpack.c.b16 %v370, %v366
    %v423 = vpack.c.b16 %v371, %v367
    %v424 = vpack.c.b16 %v372, %v368
    %v425 = vpack.c.b16 %v373, %v369
    %v426 = vpack.c.b16 %v378, %v374
    %v427 = vpack.c.b16 %v379, %v375
    %v428 = vpack.c.b16 %v380, %v376
    %v429 = vpack.c.b16 %v381, %v377
    %v430 = vpack.c.b16 %v386, %v382
    %v431 = vpack.c.b16 %v387, %v383
    %v432 = vpack.c.b16 %v388, %v384
    %v433 = vpack.c.b16 %v389, %v385
    %v434 = vpack.c.b16 %v394, %v390
    %v435 = vpack.c.b16 %v395, %v391
    %v436 = vpack.c.b16 %v396, %v392
    %v437 = vpack.c.b16 %v397, %v393
    %v438 = vpack.c.b16 %v402, %v398
    %v439 = vpack.c.b16 %v403, %v399
    %v440 = vpack.c.b16 %v404, %v400
    %v441 = vpack.c.b16 %v405, %v401
    %v442 = vpack.c.b16 %v410, %v406
    %v443 = vpack.c.b16 %v411, %v407
    %v444 = vpack.c.b16 %v412, %v408
    %v445 = vpack.c.b16 %v413, %v409
    %478 = vmatprep.subr.bf16.mxu0 %v443
    %479 = vmatpush1.bf16.msra.mxu0 %v442
    %480 = vmatprep.subr.bf16.mxu0 %v439
    %481 = vmatpush1.bf16.msra.mxu0 %v438
    %482 = vmatprep.subr.bf16.mxu0 %v435
    %483 = vmatpush1.bf16.msra.mxu0 %v434
    %484 = vmatprep.subr.bf16.mxu0 %v431
    %485 = vmatpush1.bf16.msra.mxu0 %v430
    %486 = vmatprep.subr.bf16.mxu0 %v427
    %487 = vmatpush1.bf16.msra.mxu0 %v426
    %488 = vmatprep.subr.bf16.mxu0 %v423
    %489 = vmatpush1.bf16.msra.mxu0 %v422
    %490 = vmatprep.subr.bf16.mxu0 %v419
    %491 = vmatpush1.bf16.msra.mxu0 %v418
    %492 = vmatprep.subr.bf16.mxu0 %v415
    %493 = vmatpush1.bf16.msra.mxu0 %v414
    %494 = vmatprep.subr.bf16.mxu0 0
    %495 = vmatpush2.bf16.msra.mxu0 0
    %496 = vmatprep.subr.bf16.mxu0 0
    %497 = vmatpush2.bf16.msra.mxu0 0
    %498 = vmatprep.subr.bf16.mxu0 0
    %499 = vmatpush2.bf16.msra.mxu0 0
    %500 = vmatprep.subr.bf16.mxu0 0
    %501 = vmatpush2.bf16.msra.mxu0 0
    %502 = vmatprep.subr.bf16.mxu0 0
    %503 = vmatpush2.bf16.msra.mxu0 0
    %504 = vmatprep.subr.bf16.mxu0 0
    %505 = vmatpush2.bf16.msra.mxu0 0
    %506 = vmatprep.subr.bf16.mxu0 0
    %507 = vmatpush2.bf16.msra.mxu0 0
    %508 = vmatprep.subr.bf16.mxu0 0
    %509 = vmatpush2.bf16.msra.mxu0 0
    %510 = vmatprep.mubr.bf16.mxu0 0
    %511 = vmatmul.mubr.bf16.gmra.mxu0 %v317
    %v512 = vpop.f32.mrf.mxu0
    %v513 = vadd.f32 0.0, %v512
    %v514 = vpop.f32.mrf.mxu0
    %v515 = vadd.f32 0.0, %v514
    %v516 = vpop.f32.mrf.mxu0
    %v517 = vpop.f32.mrf.mxu0
    %518 = vdwg.mxu0
    %519 = vmatprep.subr.bf16.mxu0 %v445
    %520 = vmatpush1.bf16.msra.mxu0 %v444
    %521 = vmatprep.subr.bf16.mxu0 %v441
    %522 = vmatpush1.bf16.msra.mxu0 %v440
    %523 = vmatprep.subr.bf16.mxu0 %v437
    %524 = vmatpush1.bf16.msra.mxu0 %v436
    %525 = vmatprep.subr.bf16.mxu0 %v433
    %526 = vmatpush1.bf16.msra.mxu0 %v432
    %527 = vmatprep.subr.bf16.mxu0 %v429
    %528 = vmatpush1.bf16.msra.mxu0 %v428
    %529 = vmatprep.subr.bf16.mxu0 %v425
    %530 = vmatpush1.bf16.msra.mxu0 %v424
    %531 = vmatprep.subr.bf16.mxu0 %v421
    %532 = vmatpush1.bf16.msra.mxu0 %v420
    %533 = vmatprep.subr.bf16.mxu0 %v417
    %534 = vmatpush1.bf16.msra.mxu0 %v416
    %535 = vmatprep.subr.bf16.mxu0 0
    %536 = vmatpush2.bf16.msra.mxu0 0
    %537 = vmatprep.subr.bf16.mxu0 0
    %538 = vmatpush2.bf16.msra.mxu0 0
    %539 = vmatprep.subr.bf16.mxu0 0
    %540 = vmatpush2.bf16.msra.mxu0 0
    %541 = vmatprep.subr.bf16.mxu0 0
    %542 = vmatpush2.bf16.msra.mxu0 0
    %543 = vmatprep.subr.bf16.mxu0 0
    %544 = vmatpush2.bf16.msra.mxu0 0
    %545 = vmatprep.subr.bf16.mxu0 0
    %546 = vmatpush2.bf16.msra.mxu0 0
    %547 = vmatprep.subr.bf16.mxu0 0
    %548 = vmatpush2.bf16.msra.mxu0 0
    %549 = vmatprep.subr.bf16.mxu0 0
    %550 = vmatpush2.bf16.msra.mxu0 0
    %551 = vmatprep.mubr.bf16.mxu0 0
    %552 = vmatmul.mubr.bf16.gmra.mxu0 %v317
    %v553 = vpop.f32.mrf.mxu0
    %v554 = vadd.f32 0.0, %v553
    %v555 = vpop.f32.mrf.mxu0
    %v556 = vadd.f32 0.0, %v555
    %v557 = vpop.f32.mrf.mxu0
    %v558 = vpop.f32.mrf.mxu0
    %559 = vdwg.mxu0
    %v592 = vunpack.c.l.b16 %v249
    %v593 = vunpack.c.h.b16 %v249
    %v594 = vunpack.c.l.b16 %v250
    %v595 = vunpack.c.h.b16 %v250
    %v596 = vunpack.c.l.b16 %v251
    %v597 = vunpack.c.h.b16 %v251
    %v598 = vunpack.c.l.b16 %v252
    %v599 = vunpack.c.h.b16 %v252
    %v600 = vunpack.c.l.b16 %v253
    %v601 = vunpack.c.h.b16 %v253
    %v602 = vunpack.c.l.b16 %v254
    %v603 = vunpack.c.h.b16 %v254
    %v604 = vunpack.c.l.b16 %v255
    %v605 = vunpack.c.h.b16 %v255
    %v606 = vunpack.c.l.b16 %v256
    %v607 = vunpack.c.h.b16 %v256
    %v608 = vunpack.c.l.b16 %v257
    %v609 = vunpack.c.h.b16 %v257
    %v610 = vunpack.c.l.b16 %v258
    %v611 = vunpack.c.h.b16 %v258
    %v612 = vunpack.c.l.b16 %v259
    %v613 = vunpack.c.h.b16 %v259
    %v614 = vunpack.c.l.b16 %v260
    %v615 = vunpack.c.h.b16 %v260
    %v616 = vunpack.c.l.b16 %v261
    %v617 = vunpack.c.h.b16 %v261
    %v618 = vunpack.c.l.b16 %v262
    %v619 = vunpack.c.h.b16 %v262
    %v620 = vunpack.c.l.b16 %v263
    %v621 = vunpack.c.h.b16 %v263
    %v622 = vunpack.c.l.b16 %v264
    %v623 = vunpack.c.h.b16 %v264
    %v624 = vunpack.c.l.b16 %v265
    %v625 = vunpack.c.h.b16 %v265
    %v626 = vunpack.c.l.b16 %v266
    %v627 = vunpack.c.h.b16 %v266
    %v628 = vunpack.c.l.b16 %v267
    %v629 = vunpack.c.h.b16 %v267
    %v630 = vunpack.c.l.b16 %v268
    %v631 = vunpack.c.h.b16 %v268
    %v632 = vunpack.c.l.b16 %v269
    %v633 = vunpack.c.h.b16 %v269
    %v634 = vunpack.c.l.b16 %v270
    %v635 = vunpack.c.h.b16 %v270
    %v636 = vunpack.c.l.b16 %v271
    %v637 = vunpack.c.h.b16 %v271
    %v638 = vunpack.c.l.b16 %v272
    %v639 = vunpack.c.h.b16 %v272
    %v640 = vunpack.c.l.b16 %v273
    %v641 = vunpack.c.h.b16 %v273
    %v642 = vunpack.c.l.b16 %v274
    %v643 = vunpack.c.h.b16 %v274
    %v644 = vunpack.c.l.b16 %v275
    %v645 = vunpack.c.h.b16 %v275
    %v646 = vunpack.c.l.b16 %v276
    %v647 = vunpack.c.h.b16 %v276
    %v648 = vunpack.c.l.b16 %v277
    %v649 = vunpack.c.h.b16 %v277
    %v650 = vunpack.c.l.b16 %v278
    %v651 = vunpack.c.h.b16 %v278
    %v652 = vunpack.c.l.b16 %v279
    %v653 = vunpack.c.h.b16 %v279
    %v654 = vunpack.c.l.b16 %v280
    %v655 = vunpack.c.h.b16 %v280
    %v656 = vpack.c.b16 %v596, %v592
    %v657 = vpack.c.b16 %v597, %v593
    %v658 = vpack.c.b16 %v598, %v594
    %v659 = vpack.c.b16 %v599, %v595
    %v660 = vpack.c.b16 %v604, %v600
    %v661 = vpack.c.b16 %v605, %v601
    %v662 = vpack.c.b16 %v606, %v602
    %v663 = vpack.c.b16 %v607, %v603
    %v664 = vpack.c.b16 %v612, %v608
    %v665 = vpack.c.b16 %v613, %v609
    %v666 = vpack.c.b16 %v614, %v610
    %v667 = vpack.c.b16 %v615, %v611
    %v668 = vpack.c.b16 %v620, %v616
    %v669 = vpack.c.b16 %v621, %v617
    %v670 = vpack.c.b16 %v622, %v618
    %v671 = vpack.c.b16 %v623, %v619
    %v672 = vpack.c.b16 %v628, %v624
    %v673 = vpack.c.b16 %v629, %v625
    %v674 = vpack.c.b16 %v630, %v626
    %v675 = vpack.c.b16 %v631, %v627
    %v676 = vpack.c.b16 %v636, %v632
    %v677 = vpack.c.b16 %v637, %v633
    %v678 = vpack.c.b16 %v638, %v634
    %v679 = vpack.c.b16 %v639, %v635
    %v680 = vpack.c.b16 %v644, %v640
    %v681 = vpack.c.b16 %v645, %v641
    %v682 = vpack.c.b16 %v646, %v642
    %v683 = vpack.c.b16 %v647, %v643
    %v684 = vpack.c.b16 %v652, %v648
    %v685 = vpack.c.b16 %v653, %v649
    %v686 = vpack.c.b16 %v654, %v650
    %v687 = vpack.c.b16 %v655, %v651
    %720 = vmatprep.subr.bf16.mxu0 %v685
    %721 = vmatpush1.bf16.msra.mxu0 %v684
    %722 = vmatprep.subr.bf16.mxu0 %v681
    %723 = vmatpush1.bf16.msra.mxu0 %v680
    %724 = vmatprep.subr.bf16.mxu0 %v677
    %725 = vmatpush1.bf16.msra.mxu0 %v676
    %726 = vmatprep.subr.bf16.mxu0 %v673
    %727 = vmatpush1.bf16.msra.mxu0 %v672
    %728 = vmatprep.subr.bf16.mxu0 %v669
    %729 = vmatpush1.bf16.msra.mxu0 %v668
    %730 = vmatprep.subr.bf16.mxu0 %v665
    %731 = vmatpush1.bf16.msra.mxu0 %v664
    %732 = vmatprep.subr.bf16.mxu0 %v661
    %733 = vmatpush1.bf16.msra.mxu0 %v660
    %734 = vmatprep.subr.bf16.mxu0 %v657
    %735 = vmatpush1.bf16.msra.mxu0 %v656
    %736 = vmatprep.subr.bf16.mxu0 0
    %737 = vmatpush2.bf16.msra.mxu0 0
    %738 = vmatprep.subr.bf16.mxu0 0
    %739 = vmatpush2.bf16.msra.mxu0 0
    %740 = vmatprep.subr.bf16.mxu0 0
    %741 = vmatpush2.bf16.msra.mxu0 0
    %742 = vmatprep.subr.bf16.mxu0 0
    %743 = vmatpush2.bf16.msra.mxu0 0
    %744 = vmatprep.subr.bf16.mxu0 0
    %745 = vmatpush2.bf16.msra.mxu0 0
    %746 = vmatprep.subr.bf16.mxu0 0
    %747 = vmatpush2.bf16.msra.mxu0 0
    %748 = vmatprep.subr.bf16.mxu0 0
    %749 = vmatpush2.bf16.msra.mxu0 0
    %750 = vmatprep.subr.bf16.mxu0 0
    %751 = vmatpush2.bf16.msra.mxu0 0
    %752 = vmatprep.mubr.bf16.mxu0 0
    %753 = vmatmul.mubr.bf16.gmra.mxu0 %v316
    %v754 = vpop.f32.mrf.mxu0
    %v755 = vadd.f32 %v513, %v754
    %v756 = vpop.f32.mrf.mxu0
    %v757 = vadd.f32 %v515, %v756
    %v758 = vpop.f32.mrf.mxu0
    %v759 = vpop.f32.mrf.mxu0
    %760 = vdwg.mxu0
    %761 = vmatprep.subr.bf16.mxu0 %v687
    %762 = vmatpush1.bf16.msra.mxu0 %v686
    %763 = vmatprep.subr.bf16.mxu0 %v683
    %764 = vmatpush1.bf16.msra.mxu0 %v682
    %765 = vmatprep.subr.bf16.mxu0 %v679
    %766 = vmatpush1.bf16.msra.mxu0 %v678
    %767 = vmatprep.subr.bf16.mxu0 %v675
    %768 = vmatpush1.bf16.msra.mxu0 %v674
    %769 = vmatprep.subr.bf16.mxu0 %v671
    %770 = vmatpush1.bf16.msra.mxu0 %v670
    %771 = vmatprep.subr.bf16.mxu0 %v667
    %772 = vmatpush1.bf16.msra.mxu0 %v666
    %773 = vmatprep.subr.bf16.mxu0 %v663
    %774 = vmatpush1.bf16.msra.mxu0 %v662
    %775 = vmatprep.subr.bf16.mxu0 %v659
    %776 = vmatpush1.bf16.msra.mxu0 %v658
    %777 = vmatprep.subr.bf16.mxu0 0
    %778 = vmatpush2.bf16.msra.mxu0 0
    %779 = vmatprep.subr.bf16.mxu0 0
    %780 = vmatpush2.bf16.msra.mxu0 0
    %781 = vmatprep.subr.bf16.mxu0 0
    %782 = vmatpush2.bf16.msra.mxu0 0
    %783 = vmatprep.subr.bf16.mxu0 0
    %784 = vmatpush2.bf16.msra.mxu0 0
    %785 = vmatprep.subr.bf16.mxu0 0
    %786 = vmatpush2.bf16.msra.mxu0 0
    %787 = vmatprep.subr.bf16.mxu0 0
    %788 = vmatpush2.bf16.msra.mxu0 0
    %789 = vmatprep.subr.bf16.mxu0 0
    %790 = vmatpush2.bf16.msra.mxu0 0
    %791 = vmatprep.subr.bf16.mxu0 0
    %792 = vmatpush2.bf16.msra.mxu0 0
    %793 = vmatprep.mubr.bf16.mxu0 0
    %794 = vmatmul.mubr.bf16.gmra.mxu0 %v316
    %v795 = vpop.f32.mrf.mxu0
    %v796 = vadd.f32 %v554, %v795
    %v797 = vpop.f32.mrf.mxu0
    %v798 = vadd.f32 %v556, %v797
    %v799 = vpop.f32.mrf.mxu0
    %v800 = vpop.f32.mrf.mxu0
    %801 = vdwg.mxu0
    %v803 = vlaneseq
    %v804 = vshrl.u32 %v803, 7
    %v805 = vsub.s32 0, %v804
    %v806 = vrot.slane %v313, %v805
    %v807 = vlaneseq
    %v808 = vshrl.u32 %v807, 7
    %v809 = vsub.s32 1, %v808
    %v810 = vrot.slane %v313, %v809
    %v811 = vlaneseq
    %v812 = vshrl.u32 %v811, 7
    %v813 = vsub.s32 2, %v812
    %v814 = vrot.slane %v313, %v813
    %v815 = vlaneseq
    %v816 = vshrl.u32 %v815, 7
    %v817 = vsub.s32 3, %v816
    %v818 = vrot.slane %v313, %v817
    %v823 = vadd.f32 %v755, %v806
    %v824 = vadd.f32 %v757, %v810
    %v825 = vadd.f32 %v796, %v814
    %v826 = vadd.f32 %v798, %v818
    %v827 = vxor.u32 %v823, 2147483648
    %v828 = vmul.f32 %v827, 1.442695
    %v829 = vpow.pop %v828
    %v830 = vadd.f32 %v829, 1.0
    %v831 = vrcp.pop %v830
    %v832 = vmul.f32 1.0, %v831
    %v833 = vxor.u32 %v824, 2147483648
    %v834 = vmul.f32 %v833, 1.442695
    %v835 = vpow.pop %v834
    %v836 = vadd.f32 %v835, 1.0
    %v837 = vrcp.pop %v836
    %v838 = vmul.f32 1.0, %v837
    %v839 = vtanh.pop %v825
    %v840 = vxor.u32 %v826, 2147483648
    %v841 = vmul.f32 %v840, 1.442695
    %v842 = vpow.pop %v841
    %v843 = vadd.f32 %v842, 1.0
    %v844 = vrcp.pop %v843
    %v845 = vmul.f32 1.0, %v844
    %v846 = vmul.f32 %v838, %v315
    %v847 = vmul.f32 %v832, %v839
    %v848 = vadd.f32 %v846, %v847
    %v849 = vtanh.pop %v848
    %v850 = vmul.f32 %v845, %v849
    %851 = vst [vmem:[%s10] sm:$0xff] %v850
    %852 = vst [vmem:[%s11] sm:$0xff] %v848
    %v853 = vld [vmem:[#allocation10] sm:$0xff]
    %v854 = vld [vmem:[#allocation10 + $0x8] sm:$0xff]
    %v855 = vld [vmem:[#allocation10 + $0x10] sm:$0xff]
    %v856 = vld [vmem:[#allocation10 + $0x18] sm:$0xff]
    %v857 = vld [vmem:[#allocation10 + $0x20] sm:$0xff]
    %v858 = vld [vmem:[#allocation10 + $0x28] sm:$0xff]
    %v859 = vld [vmem:[#allocation10 + $0x30] sm:$0xff]
    %v860 = vld [vmem:[#allocation10 + $0x38] sm:$0xff]
    %v861 = vld [vmem:[#allocation10 + $0x40] sm:$0xff]
    %v862 = vld [vmem:[#allocation10 + $0x48] sm:$0xff]
    %v863 = vld [vmem:[#allocation10 + $0x50] sm:$0xff]
    %v864 = vld [vmem:[#allocation10 + $0x58] sm:$0xff]
    %v865 = vld [vmem:[#allocation10 + $0x60] sm:$0xff]
    %v866 = vld [vmem:[#allocation10 + $0x68] sm:$0xff]
    %v867 = vld [vmem:[#allocation10 + $0x70] sm:$0xff]
    %v868 = vld [vmem:[#allocation10 + $0x78] sm:$0xff]
    %v869 = vld [vmem:[#allocation10 + $0x80] sm:$0xff]
    %v870 = vld [vmem:[#allocation10 + $0x88] sm:$0xff]
    %v871 = vld [vmem:[#allocation10 + $0x90] sm:$0xff]
    %v872 = vld [vmem:[#allocation10 + $0x98] sm:$0xff]
    %v873 = vld [vmem:[#allocation10 + $0xa0] sm:$0xff]
    %v874 = vld [vmem:[#allocation10 + $0xa8] sm:$0xff]
    %v875 = vld [vmem:[#allocation10 + $0xb0] sm:$0xff]
    %v876 = vld [vmem:[#allocation10 + $0xb8] sm:$0xff]
    %v877 = vld [vmem:[#allocation10 + $0xc0] sm:$0xff]
    %v878 = vld [vmem:[#allocation10 + $0xc8] sm:$0xff]
    %v879 = vld [vmem:[#allocation10 + $0xd0] sm:$0xff]
    %v880 = vld [vmem:[#allocation10 + $0xd8] sm:$0xff]
    %v881 = vld [vmem:[#allocation10 + $0xe0] sm:$0xff]
    %v882 = vld [vmem:[#allocation10 + $0xe8] sm:$0xff]
    %v883 = vld [vmem:[#allocation10 + $0xf0] sm:$0xff]
    %v884 = vld [vmem:[#allocation10 + $0xf8] sm:$0xff]
    %v885 = vld [vmem:[#allocation11] sm:$0xff]
    %v886 = vld [vmem:[#allocation11 + $0x8] sm:$0xff]
    %v887 = vld [vmem:[#allocation11 + $0x10] sm:$0xff]
    %v888 = vld [vmem:[#allocation11 + $0x18] sm:$0xff]
    %v889 = vld [vmem:[#allocation11 + $0x20] sm:$0xff]
    %v890 = vld [vmem:[#allocation11 + $0x28] sm:$0xff]
    %v891 = vld [vmem:[#allocation11 + $0x30] sm:$0xff]
    %v892 = vld [vmem:[#allocation11 + $0x38] sm:$0xff]
    %v893 = vld [vmem:[#allocation11 + $0x40] sm:$0xff]
    %v894 = vld [vmem:[#allocation11 + $0x48] sm:$0xff]
    %v895 = vld [vmem:[#allocation11 + $0x50] sm:$0xff]
    %v896 = vld [vmem:[#allocation11 + $0x58] sm:$0xff]
    %v897 = vld [vmem:[#allocation11 + $0x60] sm:$0xff]
    %v898 = vld [vmem:[#allocation11 + $0x68] sm:$0xff]
    %v899 = vld [vmem:[#allocation11 + $0x70] sm:$0xff]
    %v900 = vld [vmem:[#allocation11 + $0x78] sm:$0xff]
    %v901 = vld [vmem:[#allocation11 + $0x80] sm:$0xff]
    %v902 = vld [vmem:[#allocation11 + $0x88] sm:$0xff]
    %v903 = vld [vmem:[#allocation11 + $0x90] sm:$0xff]
    %v904 = vld [vmem:[#allocation11 + $0x98] sm:$0xff]
    %v905 = vld [vmem:[#allocation11 + $0xa0] sm:$0xff]
    %v906 = vld [vmem:[#allocation11 + $0xa8] sm:$0xff]
    %v907 = vld [vmem:[#allocation11 + $0xb0] sm:$0xff]
    %v908 = vld [vmem:[#allocation11 + $0xb8] sm:$0xff]
    %v909 = vld [vmem:[#allocation11 + $0xc0] sm:$0xff]
    %v910 = vld [vmem:[#allocation11 + $0xc8] sm:$0xff]
    %v911 = vld [vmem:[#allocation11 + $0xd0] sm:$0xff]
    %v912 = vld [vmem:[#allocation11 + $0xd8] sm:$0xff]
    %v913 = vld [vmem:[#allocation11 + $0xe0] sm:$0xff]
    %v914 = vld [vmem:[#allocation11 + $0xe8] sm:$0xff]
    %v915 = vld [vmem:[#allocation11 + $0xf0] sm:$0xff]
    %v916 = vld [vmem:[#allocation11 + $0xf8] sm:$0xff]
    %v917 = vld [vmem:[%s9] sm:$0xf]
    %s918 = scalar_lea.vmem %s2, 8
    %v919 = vld [vmem:[%s918] sm:$0xff]
    %s920 = scalar_lea.vmem %s3, 8
    %v921 = vld [vmem:[%s920] sm:$0xff]
    %v922 = vpack.c.bf16 %v850, %v850
    %v923 = vpack.c.bf16 %v919, %v919
    %v956 = vunpack.c.l.b16 %v885
    %v957 = vunpack.c.h.b16 %v885
    %v958 = vunpack.c.l.b16 %v886
    %v959 = vunpack.c.h.b16 %v886
    %v960 = vunpack.c.l.b16 %v887
    %v961 = vunpack.c.h.b16 %v887
    %v962 = vunpack.c.l.b16 %v888
    %v963 = vunpack.c.h.b16 %v888
    %v964 = vunpack.c.l.b16 %v889
    %v965 = vunpack.c.h.b16 %v889
    %v966 = vunpack.c.l.b16 %v890
    %v967 = vunpack.c.h.b16 %v890
    %v968 = vunpack.c.l.b16 %v891
    %v969 = vunpack.c.h.b16 %v891
    %v970 = vunpack.c.l.b16 %v892
    %v971 = vunpack.c.h.b16 %v892
    %v972 = vunpack.c.l.b16 %v893
    %v973 = vunpack.c.h.b16 %v893
    %v974 = vunpack.c.l.b16 %v894
    %v975 = vunpack.c.h.b16 %v894
    %v976 = vunpack.c.l.b16 %v895
    %v977 = vunpack.c.h.b16 %v895
    %v978 = vunpack.c.l.b16 %v896
    %v979 = vunpack.c.h.b16 %v896
    %v980 = vunpack.c.l.b16 %v897
    %v981 = vunpack.c.h.b16 %v897
    %v982 = vunpack.c.l.b16 %v898
    %v983 = vunpack.c.h.b16 %v898
    %v984 = vunpack.c.l.b16 %v899
    %v985 = vunpack.c.h.b16 %v899
    %v986 = vunpack.c.l.b16 %v900
    %v987 = vunpack.c.h.b16 %v900
    %v988 = vunpack.c.l.b16 %v901
    %v989 = vunpack.c.h.b16 %v901
    %v990 = vunpack.c.l.b16 %v902
    %v991 = vunpack.c.h.b16 %v902
    %v992 = vunpack.c.l.b16 %v903
    %v993 = vunpack.c.h.b16 %v903
    %v994 = vunpack.c.l.b16 %v904
    %v995 = vunpack.c.h.b16 %v904
    %v996 = vunpack.c.l.b16 %v905
    %v997 = vunpack.c.h.b16 %v905
    %v998 = vunpack.c.l.b16 %v906
    %v999 = vunpack.c.h.b16 %v906
    %v1000 = vunpack.c.l.b16 %v907
    %v1001 = vunpack.c.h.b16 %v907
    %v1002 = vunpack.c.l.b16 %v908
    %v1003 = vunpack.c.h.b16 %v908
    %v1004 = vunpack.c.l.b16 %v909
    %v1005 = vunpack.c.h.b16 %v909
    %v1006 = vunpack.c.l.b16 %v910
    %v1007 = vunpack.c.h.b16 %v910
    %v1008 = vunpack.c.l.b16 %v911
    %v1009 = vunpack.c.h.b16 %v911
    %v1010 = vunpack.c.l.b16 %v912
    %v1011 = vunpack.c.h.b16 %v912
    %v1012 = vunpack.c.l.b16 %v913
    %v1013 = vunpack.c.h.b16 %v913
    %v1014 = vunpack.c.l.b16 %v914
    %v1015 = vunpack.c.h.b16 %v914
    %v1016 = vunpack.c.l.b16 %v915
    %v1017 = vunpack.c.h.b16 %v915
    %v1018 = vunpack.c.l.b16 %v916
    %v1019 = vunpack.c.h.b16 %v916
    %v1020 = vpack.c.b16 %v960, %v956
    %v1021 = vpack.c.b16 %v961, %v957
    %v1022 = vpack.c.b16 %v962, %v958
    %v1023 = vpack.c.b16 %v963, %v959
    %v1024 = vpack.c.b16 %v968, %v964
    %v1025 = vpack.c.b16 %v969, %v965
    %v1026 = vpack.c.b16 %v970, %v966
    %v1027 = vpack.c.b16 %v971, %v967
    %v1028 = vpack.c.b16 %v976, %v972
    %v1029 = vpack.c.b16 %v977, %v973
    %v1030 = vpack.c.b16 %v978, %v974
    %v1031 = vpack.c.b16 %v979, %v975
    %v1032 = vpack.c.b16 %v984, %v980
    %v1033 = vpack.c.b16 %v985, %v981
    %v1034 = vpack.c.b16 %v986, %v982
    %v1035 = vpack.c.b16 %v987, %v983
    %v1036 = vpack.c.b16 %v992, %v988
    %v1037 = vpack.c.b16 %v993, %v989
    %v1038 = vpack.c.b16 %v994, %v990
    %v1039 = vpack.c.b16 %v995, %v991
    %v1040 = vpack.c.b16 %v1000, %v996
    %v1041 = vpack.c.b16 %v1001, %v997
    %v1042 = vpack.c.b16 %v1002, %v998
    %v1043 = vpack.c.b16 %v1003, %v999
    %v1044 = vpack.c.b16 %v1008, %v1004
    %v1045 = vpack.c.b16 %v1009, %v1005
    %v1046 = vpack.c.b16 %v1010, %v1006
    %v1047 = vpack.c.b16 %v1011, %v1007
    %v1048 = vpack.c.b16 %v1016, %v1012
    %v1049 = vpack.c.b16 %v1017, %v1013
    %v1050 = vpack.c.b16 %v1018, %v1014
    %v1051 = vpack.c.b16 %v1019, %v1015
    %1084 = vmatprep.subr.bf16.mxu0 %v1049
    %1085 = vmatpush1.bf16.msra.mxu0 %v1048
    %1086 = vmatprep.subr.bf16.mxu0 %v1045
    %1087 = vmatpush1.bf16.msra.mxu0 %v1044
    %1088 = vmatprep.subr.bf16.mxu0 %v1041
    %1089 = vmatpush1.bf16.msra.mxu0 %v1040
    %1090 = vmatprep.subr.bf16.mxu0 %v1037
    %1091 = vmatpush1.bf16.msra.mxu0 %v1036
    %1092 = vmatprep.subr.bf16.mxu0 %v1033
    %1093 = vmatpush1.bf16.msra.mxu0 %v1032
    %1094 = vmatprep.subr.bf16.mxu0 %v1029
    %1095 = vmatpush1.bf16.msra.mxu0 %v1028
    %1096 = vmatprep.subr.bf16.mxu0 %v1025
    %1097 = vmatpush1.bf16.msra.mxu0 %v1024
    %1098 = vmatprep.subr.bf16.mxu0 %v1021
    %1099 = vmatpush1.bf16.msra.mxu0 %v1020
    %1100 = vmatprep.subr.bf16.mxu0 0
    %1101 = vmatpush2.bf16.msra.mxu0 0
    %1102 = vmatprep.subr.bf16.mxu0 0
    %1103 = vmatpush2.bf16.msra.mxu0 0
    %1104 = vmatprep.subr.bf16.mxu0 0
    %1105 = vmatpush2.bf16.msra.mxu0 0
    %1106 = vmatprep.subr.bf16.mxu0 0
    %1107 = vmatpush2.bf16.msra.mxu0 0
    %1108 = vmatprep.subr.bf16.mxu0 0
    %1109 = vmatpush2.bf16.msra.mxu0 0
    %1110 = vmatprep.subr.bf16.mxu0 0
    %1111 = vmatpush2.bf16.msra.mxu0 0
    %1112 = vmatprep.subr.bf16.mxu0 0
    %1113 = vmatpush2.bf16.msra.mxu0 0
    %1114 = vmatprep.subr.bf16.mxu0 0
    %1115 = vmatpush2.bf16.msra.mxu0 0
    %1116 = vmatprep.mubr.bf16.mxu0 0
    %1117 = vmatmul.mubr.bf16.gmra.mxu0 %v923
    %v1118 = vpop.f32.mrf.mxu0
    %v1119 = vadd.f32 0.0, %v1118
    %v1120 = vpop.f32.mrf.mxu0
    %v1121 = vadd.f32 0.0, %v1120
    %v1122 = vpop.f32.mrf.mxu0
    %v1123 = vpop.f32.mrf.mxu0
    %1124 = vdwg.mxu0
    %1125 = vmatprep.subr.bf16.mxu0 %v1051
    %1126 = vmatpush1.bf16.msra.mxu0 %v1050
    %1127 = vmatprep.subr.bf16.mxu0 %v1047
    %1128 = vmatpush1.bf16.msra.mxu0 %v1046
    %1129 = vmatprep.subr.bf16.mxu0 %v1043
    %1130 = vmatpush1.bf16.msra.mxu0 %v1042
    %1131 = vmatprep.subr.bf16.mxu0 %v1039
    %1132 = vmatpush1.bf16.msra.mxu0 %v1038
    %1133 = vmatprep.subr.bf16.mxu0 %v1035
    %1134 = vmatpush1.bf16.msra.mxu0 %v1034
    %1135 = vmatprep.subr.bf16.mxu0 %v1031
    %1136 = vmatpush1.bf16.msra.mxu0 %v1030
    %1137 = vmatprep.subr.bf16.mxu0 %v1027
    %1138 = vmatpush1.bf16.msra.mxu0 %v1026
    %1139 = vmatprep.subr.bf16.mxu0 %v1023
    %1140 = vmatpush1.bf16.msra.mxu0 %v1022
    %1141 = vmatprep.subr.bf16.mxu0 0
    %1142 = vmatpush2.bf16.msra.mxu0 0
    %1143 = vmatprep.subr.bf16.mxu0 0
    %1144 = vmatpush2.bf16.msra.mxu0 0
    %1145 = vmatprep.subr.bf16.mxu0 0
    %1146 = vmatpush2.bf16.msra.mxu0 0
    %1147 = vmatprep.subr.bf16.mxu0 0
    %1148 = vmatpush2.bf16.msra.mxu0 0
    %1149 = vmatprep.subr.bf16.mxu0 0
    %1150 = vmatpush2.bf16.msra.mxu0 0
    %1151 = vmatprep.subr.bf16.mxu0 0
    %1152 = vmatpush2.bf16.msra.mxu0 0
    %1153 = vmatprep.subr.bf16.mxu0 0
    %1154 = vmatpush2.bf16.msra.mxu0 0
    %1155 = vmatprep.subr.bf16.mxu0 0
    %1156 = vmatpush2.bf16.msra.mxu0 0
    %1157 = vmatprep.mubr.bf16.mxu0 0
    %1158 = vmatmul.mubr.bf16.gmra.mxu0 %v923
    %v1159 = vpop.f32.mrf.mxu0
    %v1160 = vadd.f32 0.0, %v1159
    %v1161 = vpop.f32.mrf.mxu0
    %v1162 = vadd.f32 0.0, %v1161
    %v1163 = vpop.f32.mrf.mxu0
    %v1164 = vpop.f32.mrf.mxu0
    %1165 = vdwg.mxu0
    %v1198 = vunpack.c.l.b16 %v853
    %v1199 = vunpack.c.h.b16 %v853
    %v1200 = vunpack.c.l.b16 %v854
    %v1201 = vunpack.c.h.b16 %v854
    %v1202 = vunpack.c.l.b16 %v855
    %v1203 = vunpack.c.h.b16 %v855
    %v1204 = vunpack.c.l.b16 %v856
    %v1205 = vunpack.c.h.b16 %v856
    %v1206 = vunpack.c.l.b16 %v857
    %v1207 = vunpack.c.h.b16 %v857
    %v1208 = vunpack.c.l.b16 %v858
    %v1209 = vunpack.c.h.b16 %v858
    %v1210 = vunpack.c.l.b16 %v859
    %v1211 = vunpack.c.h.b16 %v859
    %v1212 = vunpack.c.l.b16 %v860
    %v1213 = vunpack.c.h.b16 %v860
    %v1214 = vunpack.c.l.b16 %v861
    %v1215 = vunpack.c.h.b16 %v861
    %v1216 = vunpack.c.l.b16 %v862
    %v1217 = vunpack.c.h.b16 %v862
    %v1218 = vunpack.c.l.b16 %v863
    %v1219 = vunpack.c.h.b16 %v863
    %v1220 = vunpack.c.l.b16 %v864
    %v1221 = vunpack.c.h.b16 %v864
    %v1222 = vunpack.c.l.b16 %v865
    %v1223 = vunpack.c.h.b16 %v865
    %v1224 = vunpack.c.l.b16 %v866
    %v1225 = vunpack.c.h.b16 %v866
    %v1226 = vunpack.c.l.b16 %v867
    %v1227 = vunpack.c.h.b16 %v867
    %v1228 = vunpack.c.l.b16 %v868
    %v1229 = vunpack.c.h.b16 %v868
    %v1230 = vunpack.c.l.b16 %v869
    %v1231 = vunpack.c.h.b16 %v869
    %v1232 = vunpack.c.l.b16 %v870
    %v1233 = vunpack.c.h.b16 %v870
    %v1234 = vunpack.c.l.b16 %v871
    %v1235 = vunpack.c.h.b16 %v871
    %v1236 = vunpack.c.l.b16 %v872
    %v1237 = vunpack.c.h.b16 %v872
    %v1238 = vunpack.c.l.b16 %v873
    %v1239 = vunpack.c.h.b16 %v873
    %v1240 = vunpack.c.l.b16 %v874
    %v1241 = vunpack.c.h.b16 %v874
    %v1242 = vunpack.c.l.b16 %v875
    %v1243 = vunpack.c.h.b16 %v875
    %v1244 = vunpack.c.l.b16 %v876
    %v1245 = vunpack.c.h.b16 %v876
    %v1246 = vunpack.c.l.b16 %v877
    %v1247 = vunpack.c.h.b16 %v877
    %v1248 = vunpack.c.l.b16 %v878
    %v1249 = vunpack.c.h.b16 %v878
    %v1250 = vunpack.c.l.b16 %v879
    %v1251 = vunpack.c.h.b16 %v879
    %v1252 = vunpack.c.l.b16 %v880
    %v1253 = vunpack.c.h.b16 %v880
    %v1254 = vunpack.c.l.b16 %v881
    %v1255 = vunpack.c.h.b16 %v881
    %v1256 = vunpack.c.l.b16 %v882
    %v1257 = vunpack.c.h.b16 %v882
    %v1258 = vunpack.c.l.b16 %v883
    %v1259 = vunpack.c.h.b16 %v883
    %v1260 = vunpack.c.l.b16 %v884
    %v1261 = vunpack.c.h.b16 %v884
    %v1262 = vpack.c.b16 %v1202, %v1198
    %v1263 = vpack.c.b16 %v1203, %v1199
    %v1264 = vpack.c.b16 %v1204, %v1200
    %v1265 = vpack.c.b16 %v1205, %v1201
    %v1266 = vpack.c.b16 %v1210, %v1206
    %v1267 = vpack.c.b16 %v1211, %v1207
    %v1268 = vpack.c.b16 %v1212, %v1208
    %v1269 = vpack.c.b16 %v1213, %v1209
    %v1270 = vpack.c.b16 %v1218, %v1214
    %v1271 = vpack.c.b16 %v1219, %v1215
    %v1272 = vpack.c.b16 %v1220, %v1216
    %v1273 = vpack.c.b16 %v1221, %v1217
    %v1274 = vpack.c.b16 %v1226, %v1222
    %v1275 = vpack.c.b16 %v1227, %v1223
    %v1276 = vpack.c.b16 %v1228, %v1224
    %v1277 = vpack.c.b16 %v1229, %v1225
    %v1278 = vpack.c.b16 %v1234, %v1230
    %v1279 = vpack.c.b16 %v1235, %v1231
    %v1280 = vpack.c.b16 %v1236, %v1232
    %v1281 = vpack.c.b16 %v1237, %v1233
    %v1282 = vpack.c.b16 %v1242, %v1238
    %v1283 = vpack.c.b16 %v1243, %v1239
    %v1284 = vpack.c.b16 %v1244, %v1240
    %v1285 = vpack.c.b16 %v1245, %v1241
    %v1286 = vpack.c.b16 %v1250, %v1246
    %v1287 = vpack.c.b16 %v1251, %v1247
    %v1288 = vpack.c.b16 %v1252, %v1248
    %v1289 = vpack.c.b16 %v1253, %v1249
    %v1290 = vpack.c.b16 %v1258, %v1254
    %v1291 = vpack.c.b16 %v1259, %v1255
    %v1292 = vpack.c.b16 %v1260, %v1256
    %v1293 = vpack.c.b16 %v1261, %v1257
    %1326 = vmatprep.subr.bf16.mxu0 %v1291
    %1327 = vmatpush1.bf16.msra.mxu0 %v1290
    %1328 = vmatprep.subr.bf16.mxu0 %v1287
    %1329 = vmatpush1.bf16.msra.mxu0 %v1286
    %1330 = vmatprep.subr.bf16.mxu0 %v1283
    %1331 = vmatpush1.bf16.msra.mxu0 %v1282
    %1332 = vmatprep.subr.bf16.mxu0 %v1279
    %1333 = vmatpush1.bf16.msra.mxu0 %v1278
    %1334 = vmatprep.subr.bf16.mxu0 %v1275
    %1335 = vmatpush1.bf16.msra.mxu0 %v1274
    %1336 = vmatprep.subr.bf16.mxu0 %v1271
    %1337 = vmatpush1.bf16.msra.mxu0 %v1270
    %1338 = vmatprep.subr.bf16.mxu0 %v1267
    %1339 = vmatpush1.bf16.msra.mxu0 %v1266
    %1340 = vmatprep.subr.bf16.mxu0 %v1263
    %1341 = vmatpush1.bf16.msra.mxu0 %v1262
    %1342 = vmatprep.subr.bf16.mxu0 0
    %1343 = vmatpush2.bf16.msra.mxu0 0
    %1344 = vmatprep.subr.bf16.mxu0 0
    %1345 = vmatpush2.bf16.msra.mxu0 0
    %1346 = vmatprep.subr.bf16.mxu0 0
    %1347 = vmatpush2.bf16.msra.mxu0 0
    %1348 = vmatprep.subr.bf16.mxu0 0
    %1349 = vmatpush2.bf16.msra.mxu0 0
    %1350 = vmatprep.subr.bf16.mxu0 0
    %1351 = vmatpush2.bf16.msra.mxu0 0
    %1352 = vmatprep.subr.bf16.mxu0 0
    %1353 = vmatpush2.bf16.msra.mxu0 0
    %1354 = vmatprep.subr.bf16.mxu0 0
    %1355 = vmatpush2.bf16.msra.mxu0 0
    %1356 = vmatprep.subr.bf16.mxu0 0
    %1357 = vmatpush2.bf16.msra.mxu0 0
    %1358 = vmatprep.mubr.bf16.mxu0 0
    %1359 = vmatmul.mubr.bf16.gmra.mxu0 %v922
    %v1360 = vpop.f32.mrf.mxu0
    %v1361 = vadd.f32 %v1119, %v1360
    %v1362 = vpop.f32.mrf.mxu0
    %v1363 = vadd.f32 %v1121, %v1362
    %v1364 = vpop.f32.mrf.mxu0
    %v1365 = vpop.f32.mrf.mxu0
    %1366 = vdwg.mxu0
    %1367 = vmatprep.subr.bf16.mxu0 %v1293
    %1368 = vmatpush1.bf16.msra.mxu0 %v1292
    %1369 = vmatprep.subr.bf16.mxu0 %v1289
    %1370 = vmatpush1.bf16.msra.mxu0 %v1288
    %1371 = vmatprep.subr.bf16.mxu0 %v1285
    %1372 = vmatpush1.bf16.msra.mxu0 %v1284
    %1373 = vmatprep.subr.bf16.mxu0 %v1281
    %1374 = vmatpush1.bf16.msra.mxu0 %v1280
    %1375 = vmatprep.subr.bf16.mxu0 %v1277
    %1376 = vmatpush1.bf16.msra.mxu0 %v1276
    %1377 = vmatprep.subr.bf16.mxu0 %v1273
    %1378 = vmatpush1.bf16.msra.mxu0 %v1272
    %1379 = vmatprep.subr.bf16.mxu0 %v1269
    %1380 = vmatpush1.bf16.msra.mxu0 %v1268
    %1381 = vmatprep.subr.bf16.mxu0 %v1265
    %1382 = vmatpush1.bf16.msra.mxu0 %v1264
    %1383 = vmatprep.subr.bf16.mxu0 0
    %1384 = vmatpush2.bf16.msra.mxu0 0
    %1385 = vmatprep.subr.bf16.mxu0 0
    %1386 = vmatpush2.bf16.msra.mxu0 0
    %1387 = vmatprep.subr.bf16.mxu0 0
    %1388 = vmatpush2.bf16.msra.mxu0 0
    %1389 = vmatprep.subr.bf16.mxu0 0
    %1390 = vmatpush2.bf16.msra.mxu0 0
    %1391 = vmatprep.subr.bf16.mxu0 0
    %1392 = vmatpush2.bf16.msra.mxu0 0
    %1393 = vmatprep.subr.bf16.mxu0 0
    %1394 = vmatpush2.bf16.msra.mxu0 0
    %1395 = vmatprep.subr.bf16.mxu0 0
    %1396 = vmatpush2.bf16.msra.mxu0 0
    %1397 = vmatprep.subr.bf16.mxu0 0
    %1398 = vmatpush2.bf16.msra.mxu0 0
    %1399 = vmatprep.mubr.bf16.mxu0 0
    %1400 = vmatmul.mubr.bf16.gmra.mxu0 %v922
    %v1401 = vpop.f32.mrf.mxu0
    %v1402 = vadd.f32 %v1160, %v1401
    %v1403 = vpop.f32.mrf.mxu0
    %v1404 = vadd.f32 %v1162, %v1403
    %v1405 = vpop.f32.mrf.mxu0
    %v1406 = vpop.f32.mrf.mxu0
    %1407 = vdwg.mxu0
    %v1409 = vlaneseq
    %v1410 = vshrl.u32 %v1409, 7
    %v1411 = vsub.s32 0, %v1410
    %v1412 = vrot.slane %v917, %v1411
    %v1413 = vlaneseq
    %v1414 = vshrl.u32 %v1413, 7
    %v1415 = vsub.s32 1, %v1414
    %v1416 = vrot.slane %v917, %v1415
    %v1417 = vlaneseq
    %v1418 = vshrl.u32 %v1417, 7
    %v1419 = vsub.s32 2, %v1418
    %v1420 = vrot.slane %v917, %v1419
    %v1421 = vlaneseq
    %v1422 = vshrl.u32 %v1421, 7
    %v1423 = vsub.s32 3, %v1422
    %v1424 = vrot.slane %v917, %v1423
    %v1429 = vadd.f32 %v1361, %v1412
    %v1430 = vadd.f32 %v1363, %v1416
    %v1431 = vadd.f32 %v1402, %v1420
    %v1432 = vadd.f32 %v1404, %v1424
    %v1433 = vxor.u32 %v1429, 2147483648
    %v1434 = vmul.f32 %v1433, 1.442695
    %v1435 = vpow.pop %v1434
    %v1436 = vadd.f32 %v1435, 1.0
    %v1437 = vrcp.pop %v1436
    %v1438 = vmul.f32 1.0, %v1437
    %v1439 = vxor.u32 %v1430, 2147483648
    %v1440 = vmul.f32 %v1439, 1.442695
    %v1441 = vpow.pop %v1440
    %v1442 = vadd.f32 %v1441, 1.0
    %v1443 = vrcp.pop %v1442
    %v1444 = vmul.f32 1.0, %v1443
    %v1445 = vtanh.pop %v1431
    %v1446 = vxor.u32 %v1432, 2147483648
    %v1447 = vmul.f32 %v1446, 1.442695
    %v1448 = vpow.pop %v1447
    %v1449 = vadd.f32 %v1448, 1.0
    %v1450 = vrcp.pop %v1449
    %v1451 = vmul.f32 1.0, %v1450
    %v1452 = vmul.f32 %v1444, %v921
    %v1453 = vmul.f32 %v1438, %v1445
    %v1454 = vadd.f32 %v1452, %v1453
    %v1455 = vtanh.pop %v1454
    %v1456 = vmul.f32 %v1451, %v1455
    %s1457 = scalar_lea.vmem %s10, 8
    %1458 = vst [vmem:[%s1457] sm:$0xff] %v1456
    %s1459 = scalar_lea.vmem %s11, 8
    %1460 = vst [vmem:[%s1459] sm:$0xff] %v1454
    %1461 = vst [vmem:[%s12] sm:$0xff] %v1456
    // Predicated region
    $region90: #{decoder_forward.2} parent=1 // pred_check
      _
    $region91: #{decoder_forward.2} parent=1 // pred_check_branch
      %1463 = sbr.rel (0) target = $region93
    $region92: #{decoder_forward.2} parent=1 // pred_region
      _
    $region93: #{decoder_forward.2} parent=1 // pred_fallthru
      _
    // Predicated region
    $region94: #{decoder_forward.2} parent=1 // pred_check
      _
    $region95: #{decoder_forward.2} parent=1 // pred_check_branch
      %1465 = sbr.rel (0) target = $region97
    $region96: #{decoder_forward.2} parent=1 // pred_region
      _
    $region97: #{decoder_forward.2} parent=1 // pred_fallthru
      _
    // Predicated region
    $region98: #{decoder_forward.2} parent=1 // pred_check
      _
    $region99: #{decoder_forward.2} parent=1 // pred_check_branch
      %1467 = sbr.rel (0) target = $region101
    $region100: #{decoder_forward.2} parent=1 // pred_region
      _
    $region101: #{decoder_forward.2} parent=1 // pred_fallthru
      _
    // Predicated region
    $region102: #{decoder_forward.2} parent=1 // pred_check
      _
    $region103: #{decoder_forward.2} parent=1 // pred_check_branch
      %1469 = sbr.rel (0) target = $region105
    $region104: #{decoder_forward.2} parent=1 // pred_region
      _
    $region105: #{decoder_forward.2} parent=1 // pred_fallthru
      _
    // Predicated region
    $region106: #{decoder_forward.2} parent=1 // pred_check
      _
    $region107: #{decoder_forward.2} parent=1 // pred_check_branch
      %1471 = sbr.rel (0) target = $region109
    $region108: #{decoder_forward.2} parent=1 // pred_region
      _
    $region109: #{decoder_forward.2} parent=1 // pred_fallthru
      _
    // Predicated region
    $region110: #{decoder_forward.2} parent=1 // pred_check
      _
    $region111: #{decoder_forward.2} parent=1 // pred_check_branch
      %1473 = sbr.rel (0) target = $region113
    $region112: #{decoder_forward.2} parent=1 // pred_region
      _
    $region113: #{decoder_forward.2} parent=1 // pred_fallthru
      _
    %1474 = vsyncpa [#allocation5], 1
    %1475 = vsyncpa [#allocation9], 1
    %1476 = vsyncpa [#allocation12], 1
    %1477 = vsyncpa [#allocation6], 1
  %1478 = vsyncmov [#allocation3]
  %s1479 = vpop.sfrf %1478
  %p1480 = scmp.eq.s32.totalorder %s1479, 0
  %p1481 = pneg %p1480
  %1483 = shalt.err (%p1481)
  %s1484 = scalar_lea.sflag [#allocation3], 1
  %1485 = vsyncmov %s1484
  %s1486 = vpop.sfrf %1485
  %p1487 = scmp.eq.s32.totalorder %s1486, 0
  %p1488 = pneg %p1487
  %1490 = shalt.err (%p1488)
  %s1491 = scalar_lea.sflag [#allocation3], 2
  %1492 = vsyncmov %s1491
  %s1493 = vpop.sfrf %1492
  %p1494 = scmp.eq.s32.totalorder %s1493, 0
  %p1495 = pneg %p1494
  %1497 = shalt.err (%p1495)
  %s1498 = scalar_lea.sflag [#allocation3], 3
  %1499 = vsyncmov %s1498
  %s1500 = vpop.sfrf %1499
  %p1501 = scmp.eq.s32.totalorder %s1500, 0
  %p1502 = pneg %p1501
  %1504 = shalt.err (%p1502)
  %s1505 = scalar_lea.sflag [#allocation3], 4
  %1506 = vsyncmov %s1505
  %s1507 = vpop.sfrf %1506
  %p1508 = scmp.eq.s32.totalorder %s1507, 0
  %p1509 = pneg %p1508
  %1511 = shalt.err (%p1509)
  %s1512 = scalar_lea.sflag [#allocation3], 5
  %1513 = vsyncmov %s1512
  %s1514 = vpop.sfrf %1513
  %p1515 = scmp.eq.s32.totalorder %s1514, 0
  %p1516 = pneg %p1515
  %1518 = shalt.err (%p1516)
  %s1519 = scalar_lea.sflag [#allocation3], 6
  %1520 = vsyncmov %s1519
  %s1521 = vpop.sfrf %1520
  %p1522 = scmp.eq.s32.totalorder %s1521, 0
  %p1523 = pneg %p1522
  %1525 = shalt.err (%p1523)
  %s1526 = scalar_lea.sflag [#allocation3], 7
  %1527 = vsyncmov %s1526
  %s1528 = vpop.sfrf %1527
  %p1529 = scmp.eq.s32.totalorder %s1528, 0
  %p1530 = pneg %p1529
  %1532 = shalt.err (%p1530)

</llo_original>
